<compile_context>
chip_gen: v6e
topology: v6e:2x2x1
jax: 0.10.0
libtpu: 0.0.40
codegen_flags: <defaults>
</compile_context>

<pallas_src>
import functools
import math

import jax
import jax.numpy as jnp
from jax import lax
from jax.experimental import pallas as pl
from jax.experimental.pallas import tpu as pltpu


# -----------------------------------------------------------------------------
# Fused forward kernel: one grid step = one batch element
# -----------------------------------------------------------------------------
def _fused_mhca_kernel(x_ref, y_ref, wq_ref, bq_ref, wkv_ref, bkv_ref,
                       wo_ref, bo_ref, o_ref, attn_scratch,
                       *, num_heads, head_dim, scale):
    D = num_heads * head_dim
    x = x_ref[0]                                   # (Sq, D)   depth features
    y = y_ref[0]                                   # (Skv, D)  visual features

    # Q projection; fold 1/sqrt(head_dim) into q (cheaper than scaling scores).
    q = (jnp.dot(x, wq_ref[...], preferred_element_type=jnp.float32)
         + bq_ref[...]) * scale                    # (Sq, D) f32

    # Fused K/V projection: single matmul against stacked [Wk | Wv].
    kv = (jnp.dot(y, wkv_ref[...], preferred_element_type=jnp.float32)
          + bkv_ref[...])                          # (Skv, 2D) f32

    # Per-head attention. Heads are lane slices of q / kv (no materialized
    # (B,H,S,hd) transposes); static Python loop is unrolled at trace time.
    for h in range(num_heads):
        lo = h * head_dim
        q_h = q[:, lo:lo + head_dim]               # (Sq, hd)
        k_h = kv[:, lo:lo + head_dim]              # (Skv, hd)
        v_h = kv[:, D + lo:D + lo + head_dim]      # (Skv, hd)

        # Contract last dims directly -> no XLU transpose for K.
        s = lax.dot_general(q_h, k_h, (((1,), (1,)), ((), ())),
                            preferred_element_type=jnp.float32)  # (Sq, Skv)
        m = jnp.max(s, axis=-1, keepdims=True)
        p = jnp.exp(s - m)
        denom = jnp.sum(p, axis=-1, keepdims=True)
        attn = p * pl.reciprocal(denom, approx=True)
        attn_scratch[:, lo:lo + head_dim] = jnp.dot(
            attn, v_h, preferred_element_type=jnp.float32)

    # Output projection straight from the lane-dense (Sq, D) slab.
    out = (jnp.dot(attn_scratch[...], wo_ref[...],
                   preferred_element_type=jnp.float32) + bo_ref[...])
    o_ref[0] = out.astype(o_ref.dtype)


# -----------------------------------------------------------------------------
# Wrapper: single pallas_call over the batch
# -----------------------------------------------------------------------------
def multihead_cross_attention(depth_features, visual_features, params, num_heads):
    B, Sq, D = depth_features.shape
    Skv = visual_features.shape[1]
    head_dim = D // num_heads
    scale = 1.0 / math.sqrt(head_dim)

    # Stack K/V weights so the kernel does a single matmul on visual_features.
    wkv = jnp.concatenate([params["wk"], params["wv"]], axis=1)       # (D, 2D)
    bkv = jnp.concatenate([params["bk"], params["bv"]]).reshape(1, 2 * D)
    bq = params["bq"].reshape(1, D)
    bo = params["bo"].reshape(1, D)

    kernel = functools.partial(_fused_mhca_kernel, num_heads=num_heads,
                               head_dim=head_dim, scale=scale)

    # TODO(synk): for large d_model (>= ~1024) tile the weight blocks along
    # Dout (and cast to bf16) so double-buffered blocks fit v7x's 64 MiB /
    # v5e's 16 MiB scoped VMEM budgets; at these sizes full weights are fine.
    return pl.pallas_call(
        kernel,
        out_shape=jax.ShapeDtypeStruct((B, Sq, D), depth_features.dtype),
        grid=(B,),
        in_specs=[
            pl.BlockSpec((1, Sq, D), lambda b: (b, 0, 0)),     # depth features
            pl.BlockSpec((1, Skv, D), lambda b: (b, 0, 0)),    # visual features
            pl.BlockSpec((D, D), lambda b: (0, 0)),            # Wq
            pl.BlockSpec((1, D), lambda b: (0, 0)),            # bq
            pl.BlockSpec((D, 2 * D), lambda b: (0, 0)),        # [Wk | Wv]
            pl.BlockSpec((1, 2 * D), lambda b: (0, 0)),        # [bk | bv]
            pl.BlockSpec((D, D), lambda b: (0, 0)),            # Wo
            pl.BlockSpec((1, D), lambda b: (0, 0)),            # bo
        ],
        out_specs=pl.BlockSpec((1, Sq, D), lambda b: (b, 0, 0)),
        scratch_shapes=[pltpu.VMEM((Sq, D), jnp.float32)],     # attn slab
        compiler_params=pltpu.CompilerParams(
            dimension_semantics=("parallel",)),
    )(depth_features, visual_features, params["wq"], bq, wkv, bkv,
      params["wo"], bo)


# -----------------------------------------------------------------------------
# Deterministic parameter init (shapes from nn.Linear(d_model, d_model))
# -----------------------------------------------------------------------------
def init_params(key, d_model, dtype=jnp.float32):
    bound = 1.0 / math.sqrt(d_model)
    keys = jax.random.split(key, 8)
    u = lambda k, shape: jax.random.uniform(k, shape, dtype, -bound, bound)
    return {
        "wq": u(keys[0], (d_model, d_model)), "bq": u(keys[1], (d_model,)),
        "wk": u(keys[2], (d_model, d_model)), "bk": u(keys[3], (d_model,)),
        "wv": u(keys[4], (d_model, d_model)), "bv": u(keys[5], (d_model,)),
        "wo": u(keys[6], (d_model, d_model)), "bo": u(keys[7], (d_model,)),
    }


# -----------------------------------------------------------------------------
# Pure-JAX reference (mirrors the PyTorch forward exactly) for verification
# -----------------------------------------------------------------------------
def reference_forward(depth_features, visual_features, params, num_heads):
    B, Sq, d_model = depth_features.shape
    Skv = visual_features.shape[1]
    head_dim = d_model // num_heads

    q = depth_features @ params["wq"] + params["bq"]
    k = visual_features @ params["wk"] + params["bk"]
    v = visual_features @ params["wv"] + params["bv"]

    q = q.reshape(B, Sq, num_heads, head_dim).transpose(0, 2, 1, 3)
    k = k.reshape(B, Skv, num_heads, head_dim).transpose(0, 2, 1, 3)
    v = v.reshape(B, Skv, num_heads, head_dim).transpose(0, 2, 1, 3)

    scores = jnp.einsum("bhqd,bhkd->bhqk", q, k) / math.sqrt(head_dim)
    weights = jax.nn.softmax(scores, axis=-1)
    out = jnp.einsum("bhqk,bhkd->bhqd", weights, v)
    out = out.transpose(0, 2, 1, 3).reshape(B, Sq, d_model)
    return out @ params["wo"] + params["bo"]


if __name__ == "__main__":
    B = 2
    Sq = 8      # depth-feature sequence length
    Skv = 16    # visual-feature sequence length
    d_model = 32
    num_heads = 4

    key = jax.random.PRNGKey(0)
    k_depth, k_visual, k_params = jax.random.split(key, 3)

    depth_features = jax.random.normal(k_depth, (B, Sq, d_model), jnp.float32)
    visual_features = jax.random.normal(k_visual, (B, Skv, d_model), jnp.float32)
    params = init_params(k_params, d_model)

    out = multihead_cross_attention(depth_features, visual_features, params, num_heads)
    out = jax.block_until_ready(out)

    ref = reference_forward(depth_features, visual_features, params, num_heads)
    assert out.shape == (B, Sq, d_model)
    # Tolerance accounts for the EUP approx reciprocal in the softmax denom
    # (~1e-4 relative); real layout/semantics bugs give O(1) errors.
    assert jnp.allclose(out, ref, atol=2e-3, rtol=2e-3), "mismatch vs reference"

    print("KERNEL_OK")
</pallas_src>

<mosaic_0001>
module attributes {stable_mosaic.version = 11 : i64} {
  func.func @_fused_mhca_kernel(%arg0: i32, %arg1: memref<1x8x32xf32, #tpu.memory_space<vmem>>, %arg2: memref<1x16x32xf32, #tpu.memory_space<vmem>>, %arg3: memref<32x32xf32, #tpu.memory_space<vmem>>, %arg4: memref<1x32xf32, #tpu.memory_space<vmem>>, %arg5: memref<32x64xf32, #tpu.memory_space<vmem>>, %arg6: memref<1x64xf32, #tpu.memory_space<vmem>>, %arg7: memref<32x32xf32, #tpu.memory_space<vmem>>, %arg8: memref<1x32xf32, #tpu.memory_space<vmem>>, %arg9: memref<1x8x32xf32, #tpu.memory_space<vmem>>, %arg10: memref<8x32xf32, #tpu.memory_space<vmem>>) attributes {dimension_semantics = [#tpu.dimension_semantics<parallel>], iteration_bounds = array<i64: 2>, scalar_prefetch = 0 : i64, scratch_operands = 1 : i64, tpu.core_type = #tpu.core_type<tc>, window_params = [{transform_indices = @transform_0, window_bounds = array<i64: 1, 8, 32>}, {transform_indices = @transform_1, window_bounds = array<i64: 1, 16, 32>}, {pipeline_mode = #tpu.pipeline_mode<synchronous>, transform_indices = @transform_2, window_bounds = array<i64: 32, 32>}, {pipeline_mode = #tpu.pipeline_mode<synchronous>, transform_indices = @transform_3, window_bounds = array<i64: 1, 32>}, {pipeline_mode = #tpu.pipeline_mode<synchronous>, transform_indices = @transform_4, window_bounds = array<i64: 32, 64>}, {pipeline_mode = #tpu.pipeline_mode<synchronous>, transform_indices = @transform_5, window_bounds = array<i64: 1, 64>}, {pipeline_mode = #tpu.pipeline_mode<synchronous>, transform_indices = @transform_6, window_bounds = array<i64: 32, 32>}, {pipeline_mode = #tpu.pipeline_mode<synchronous>, transform_indices = @transform_7, window_bounds = array<i64: 1, 32>}, {transform_indices = @transform_8, window_bounds = array<i64: 1, 8, 32>}]} {
    %c0 = arith.constant 0 : index
    %c0_0 = arith.constant 0 : index
    %c0_1 = arith.constant 0 : index
    %0 = vector.load %arg1[%c0, %c0_0, %c0_1] : memref<1x8x32xf32, #tpu.memory_space<vmem>>, vector<1x8x32xf32>
    %1 = vector.shape_cast %0 : vector<1x8x32xf32> to vector<8x32xf32>
    %c0_2 = arith.constant 0 : index
    %c0_3 = arith.constant 0 : index
    %c0_4 = arith.constant 0 : index
    %2 = vector.load %arg2[%c0_2, %c0_3, %c0_4] : memref<1x16x32xf32, #tpu.memory_space<vmem>>, vector<1x16x32xf32>
    %3 = vector.shape_cast %2 : vector<1x16x32xf32> to vector<16x32xf32>
    %c0_5 = arith.constant 0 : index
    %c0_6 = arith.constant 0 : index
    %4 = vector.load %arg3[%c0_5, %c0_6] : memref<32x32xf32, #tpu.memory_space<vmem>>, vector<32x32xf32>
    %cst = arith.constant dense<0.000000e+00> : vector<8x32xf32>
    %5 = tpu.matmul %1, %4, %cst {dimension_numbers = #tpu.dot_dimension_numbers<[1], [0], [0], [1], [0, 0, 1, 1], [], []>} : vector<8x32xf32>, vector<32x32xf32>, vector<8x32xf32> -> vector<8x32xf32>
    %c0_7 = arith.constant 0 : index
    %c0_8 = arith.constant 0 : index
    %6 = vector.load %arg4[%c0_7, %c0_8] : memref<1x32xf32, #tpu.memory_space<vmem>>, vector<1x32xf32>
    %7 = vector.broadcast %6 : vector<1x32xf32> to vector<8x32xf32>
    %8 = arith.addf %5, %7 : vector<8x32xf32>
    %cst_9 = arith.constant 0.353553385 : f32
    %9 = vector.broadcast %cst_9 : f32 to vector<8x32xf32>
    %10 = arith.mulf %8, %9 : vector<8x32xf32>
    %c0_10 = arith.constant 0 : index
    %c0_11 = arith.constant 0 : index
    %11 = vector.load %arg5[%c0_10, %c0_11] : memref<32x64xf32, #tpu.memory_space<vmem>>, vector<32x64xf32>
    %cst_12 = arith.constant dense<0.000000e+00> : vector<16x64xf32>
    %12 = tpu.matmul %3, %11, %cst_12 {dimension_numbers = #tpu.dot_dimension_numbers<[1], [0], [0], [1], [0, 0, 1, 1], [], []>} : vector<16x32xf32>, vector<32x64xf32>, vector<16x64xf32> -> vector<16x64xf32>
    %c0_13 = arith.constant 0 : index
    %c0_14 = arith.constant 0 : index
    %13 = vector.load %arg6[%c0_13, %c0_14] : memref<1x64xf32, #tpu.memory_space<vmem>>, vector<1x64xf32>
    %14 = vector.broadcast %13 : vector<1x64xf32> to vector<16x64xf32>
    %15 = arith.addf %12, %14 : vector<16x64xf32>
    %16 = vector.extract_strided_slice %10 {offsets = [0, 0], sizes = [8, 8], strides = [1, 1]} : vector<8x32xf32> to vector<8x8xf32>
    %17 = vector.extract_strided_slice %15 {offsets = [0, 0], sizes = [16, 8], strides = [1, 1]} : vector<16x64xf32> to vector<16x8xf32>
    %18 = vector.extract_strided_slice %15 {offsets = [0, 32], sizes = [16, 8], strides = [1, 1]} : vector<16x64xf32> to vector<16x8xf32>
    %cst_15 = arith.constant dense<0.000000e+00> : vector<8x16xf32>
    %19 = tpu.matmul %16, %17, %cst_15 {dimension_numbers = #tpu.dot_dimension_numbers<[1], [1], [0], [0], [0, 0, 1, 0], [], []>} : vector<8x8xf32>, vector<16x8xf32>, vector<8x16xf32> -> vector<8x16xf32>
    %cst_16 = arith.constant dense<0xFF800000> : vector<8xf32>
    %20 = vector.multi_reduction <maximumf>, %19, %cst_16 [1] : vector<8x16xf32> to vector<8xf32>
    %21 = vector.shape_cast %20 : vector<8xf32> to vector<8x1xf32>
    %22 = vector.broadcast %21 : vector<8x1xf32> to vector<8x16xf32>
    %23 = arith.subf %19, %22 : vector<8x16xf32>
    %24 = math.exp %23 : vector<8x16xf32>
    %cst_17 = arith.constant dense<0.000000e+00> : vector<8xf32>
    %25 = vector.multi_reduction <add>, %24, %cst_17 [1] : vector<8x16xf32> to vector<8xf32>
    %26 = vector.shape_cast %25 : vector<8xf32> to vector<8x1xf32>
    %27 = tpu.reciprocal %26 {approx = true} : vector<8x1xf32> -> vector<8x1xf32>
    %28 = vector.broadcast %27 : vector<8x1xf32> to vector<8x16xf32>
    %29 = arith.mulf %24, %28 : vector<8x16xf32>
    %cst_18 = arith.constant dense<0.000000e+00> : vector<8x8xf32>
    %30 = tpu.matmul %29, %18, %cst_18 {dimension_numbers = #tpu.dot_dimension_numbers<[1], [0], [0], [1], [0, 0, 1, 1], [], []>} : vector<8x16xf32>, vector<16x8xf32>, vector<8x8xf32> -> vector<8x8xf32>
    %c0_19 = arith.constant 0 : index
    %c0_20 = arith.constant 0 : index
    %31 = vector.load %arg10[%c0_19, %c0_20] : memref<8x32xf32, #tpu.memory_space<vmem>>, vector<8x8xf32>
    tpu.vector_store %arg10[%c0_19, %c0_20], %30 {strides = array<i32>} : memref<8x32xf32, #tpu.memory_space<vmem>>, vector<8x8xf32>,
    %32 = vector.extract_strided_slice %10 {offsets = [0, 8], sizes = [8, 8], strides = [1, 1]} : vector<8x32xf32> to vector<8x8xf32>
    %33 = vector.extract_strided_slice %15 {offsets = [0, 8], sizes = [16, 8], strides = [1, 1]} : vector<16x64xf32> to vector<16x8xf32>
    %34 = vector.extract_strided_slice %15 {offsets = [0, 40], sizes = [16, 8], strides = [1, 1]} : vector<16x64xf32> to vector<16x8xf32>
    %cst_21 = arith.constant dense<0.000000e+00> : vector<8x16xf32>
    %35 = tpu.matmul %32, %33, %cst_21 {dimension_numbers = #tpu.dot_dimension_numbers<[1], [1], [0], [0], [0, 0, 1, 0], [], []>} : vector<8x8xf32>, vector<16x8xf32>, vector<8x16xf32> -> vector<8x16xf32>
    %cst_22 = arith.constant dense<0xFF800000> : vector<8xf32>
    %36 = vector.multi_reduction <maximumf>, %35, %cst_22 [1] : vector<8x16xf32> to vector<8xf32>
    %37 = vector.shape_cast %36 : vector<8xf32> to vector<8x1xf32>
    %38 = vector.broadcast %37 : vector<8x1xf32> to vector<8x16xf32>
    %39 = arith.subf %35, %38 : vector<8x16xf32>
    %40 = math.exp %39 : vector<8x16xf32>
    %cst_23 = arith.constant dense<0.000000e+00> : vector<8xf32>
    %41 = vector.multi_reduction <add>, %40, %cst_23 [1] : vector<8x16xf32> to vector<8xf32>
    %42 = vector.shape_cast %41 : vector<8xf32> to vector<8x1xf32>
    %43 = tpu.reciprocal %42 {approx = true} : vector<8x1xf32> -> vector<8x1xf32>
    %44 = vector.broadcast %43 : vector<8x1xf32> to vector<8x16xf32>
    %45 = arith.mulf %40, %44 : vector<8x16xf32>
    %cst_24 = arith.constant dense<0.000000e+00> : vector<8x8xf32>
    %46 = tpu.matmul %45, %34, %cst_24 {dimension_numbers = #tpu.dot_dimension_numbers<[1], [0], [0], [1], [0, 0, 1, 1], [], []>} : vector<8x16xf32>, vector<16x8xf32>, vector<8x8xf32> -> vector<8x8xf32>
    %c0_25 = arith.constant 0 : index
    %c8 = arith.constant 8 : index
    %47 = vector.load %arg10[%c0_25, %c8] : memref<8x32xf32, #tpu.memory_space<vmem>>, vector<8x8xf32>
    tpu.vector_store %arg10[%c0_25, %c8], %46 {strides = array<i32>} : memref<8x32xf32, #tpu.memory_space<vmem>>, vector<8x8xf32>,
    %48 = vector.extract_strided_slice %10 {offsets = [0, 16], sizes = [8, 8], strides = [1, 1]} : vector<8x32xf32> to vector<8x8xf32>
    %49 = vector.extract_strided_slice %15 {offsets = [0, 16], sizes = [16, 8], strides = [1, 1]} : vector<16x64xf32> to vector<16x8xf32>
    %50 = vector.extract_strided_slice %15 {offsets = [0, 48], sizes = [16, 8], strides = [1, 1]} : vector<16x64xf32> to vector<16x8xf32>
    %cst_26 = arith.constant dense<0.000000e+00> : vector<8x16xf32>
    %51 = tpu.matmul %48, %49, %cst_26 {dimension_numbers = #tpu.dot_dimension_numbers<[1], [1], [0], [0], [0, 0, 1, 0], [], []>} : vector<8x8xf32>, vector<16x8xf32>, vector<8x16xf32> -> vector<8x16xf32>
    %cst_27 = arith.constant dense<0xFF800000> : vector<8xf32>
    %52 = vector.multi_reduction <maximumf>, %51, %cst_27 [1] : vector<8x16xf32> to vector<8xf32>
    %53 = vector.shape_cast %52 : vector<8xf32> to vector<8x1xf32>
    %54 = vector.broadcast %53 : vector<8x1xf32> to vector<8x16xf32>
    %55 = arith.subf %51, %54 : vector<8x16xf32>
    %56 = math.exp %55 : vector<8x16xf32>
    %cst_28 = arith.constant dense<0.000000e+00> : vector<8xf32>
    %57 = vector.multi_reduction <add>, %56, %cst_28 [1] : vector<8x16xf32> to vector<8xf32>
    %58 = vector.shape_cast %57 : vector<8xf32> to vector<8x1xf32>
    %59 = tpu.reciprocal %58 {approx = true} : vector<8x1xf32> -> vector<8x1xf32>
    %60 = vector.broadcast %59 : vector<8x1xf32> to vector<8x16xf32>
    %61 = arith.mulf %56, %60 : vector<8x16xf32>
    %cst_29 = arith.constant dense<0.000000e+00> : vector<8x8xf32>
    %62 = tpu.matmul %61, %50, %cst_29 {dimension_numbers = #tpu.dot_dimension_numbers<[1], [0], [0], [1], [0, 0, 1, 1], [], []>} : vector<8x16xf32>, vector<16x8xf32>, vector<8x8xf32> -> vector<8x8xf32>
    %c0_30 = arith.constant 0 : index
    %c16 = arith.constant 16 : index
    %63 = vector.load %arg10[%c0_30, %c16] : memref<8x32xf32, #tpu.memory_space<vmem>>, vector<8x8xf32>
    tpu.vector_store %arg10[%c0_30, %c16], %62 {strides = array<i32>} : memref<8x32xf32, #tpu.memory_space<vmem>>, vector<8x8xf32>,
    %64 = vector.extract_strided_slice %10 {offsets = [0, 24], sizes = [8, 8], strides = [1, 1]} : vector<8x32xf32> to vector<8x8xf32>
    %65 = vector.extract_strided_slice %15 {offsets = [0, 24], sizes = [16, 8], strides = [1, 1]} : vector<16x64xf32> to vector<16x8xf32>
    %66 = vector.extract_strided_slice %15 {offsets = [0, 56], sizes = [16, 8], strides = [1, 1]} : vector<16x64xf32> to vector<16x8xf32>
    %cst_31 = arith.constant dense<0.000000e+00> : vector<8x16xf32>
    %67 = tpu.matmul %64, %65, %cst_31 {dimension_numbers = #tpu.dot_dimension_numbers<[1], [1], [0], [0], [0, 0, 1, 0], [], []>} : vector<8x8xf32>, vector<16x8xf32>, vector<8x16xf32> -> vector<8x16xf32>
    %cst_32 = arith.constant dense<0xFF800000> : vector<8xf32>
    %68 = vector.multi_reduction <maximumf>, %67, %cst_32 [1] : vector<8x16xf32> to vector<8xf32>
    %69 = vector.shape_cast %68 : vector<8xf32> to vector<8x1xf32>
    %70 = vector.broadcast %69 : vector<8x1xf32> to vector<8x16xf32>
    %71 = arith.subf %67, %70 : vector<8x16xf32>
    %72 = math.exp %71 : vector<8x16xf32>
    %cst_33 = arith.constant dense<0.000000e+00> : vector<8xf32>
    %73 = vector.multi_reduction <add>, %72, %cst_33 [1] : vector<8x16xf32> to vector<8xf32>
    %74 = vector.shape_cast %73 : vector<8xf32> to vector<8x1xf32>
    %75 = tpu.reciprocal %74 {approx = true} : vector<8x1xf32> -> vector<8x1xf32>
    %76 = vector.broadcast %75 : vector<8x1xf32> to vector<8x16xf32>
    %77 = arith.mulf %72, %76 : vector<8x16xf32>
    %cst_34 = arith.constant dense<0.000000e+00> : vector<8x8xf32>
    %78 = tpu.matmul %77, %66, %cst_34 {dimension_numbers = #tpu.dot_dimension_numbers<[1], [0], [0], [1], [0, 0, 1, 1], [], []>} : vector<8x16xf32>, vector<16x8xf32>, vector<8x8xf32> -> vector<8x8xf32>
    %c0_35 = arith.constant 0 : index
    %c24 = arith.constant 24 : index
    %79 = vector.load %arg10[%c0_35, %c24] : memref<8x32xf32, #tpu.memory_space<vmem>>, vector<8x8xf32>
    tpu.vector_store %arg10[%c0_35, %c24], %78 {strides = array<i32>} : memref<8x32xf32, #tpu.memory_space<vmem>>, vector<8x8xf32>,
    %c0_36 = arith.constant 0 : index
    %c0_37 = arith.constant 0 : index
    %80 = vector.load %arg10[%c0_36, %c0_37] : memref<8x32xf32, #tpu.memory_space<vmem>>, vector<8x32xf32>
    %c0_38 = arith.constant 0 : index
    %c0_39 = arith.constant 0 : index
    %81 = vector.load %arg7[%c0_38, %c0_39] : memref<32x32xf32, #tpu.memory_space<vmem>>, vector<32x32xf32>
    %cst_40 = arith.constant dense<0.000000e+00> : vector<8x32xf32>
    %82 = tpu.matmul %80, %81, %cst_40 {dimension_numbers = #tpu.dot_dimension_numbers<[1], [0], [0], [1], [0, 0, 1, 1], [], []>} : vector<8x32xf32>, vector<32x32xf32>, vector<8x32xf32> -> vector<8x32xf32>
    %c0_41 = arith.constant 0 : index
    %c0_42 = arith.constant 0 : index
    %83 = vector.load %arg8[%c0_41, %c0_42] : memref<1x32xf32, #tpu.memory_space<vmem>>, vector<1x32xf32>
    %84 = vector.broadcast %83 : vector<1x32xf32> to vector<8x32xf32>
    %85 = arith.addf %82, %84 : vector<8x32xf32>
    %c0_43 = arith.constant 0 : index
    %c0_44 = arith.constant 0 : index
    %c0_45 = arith.constant 0 : index
    %86 = vector.load %arg9[%c0_43, %c0_44, %c0_45] : memref<1x8x32xf32, #tpu.memory_space<vmem>>, vector<1x8x32xf32>
    %87 = vector.shape_cast %86 : vector<1x8x32xf32> to vector<8x32xf32>
    %88 = vector.shape_cast %85 : vector<8x32xf32> to vector<1x8x32xf32>
    tpu.vector_store %arg9[%c0_43, %c0_44, %c0_45], %88 {strides = array<i32>} : memref<1x8x32xf32, #tpu.memory_space<vmem>>, vector<1x8x32xf32>,
    return
  }
  func.func @transform_0(%arg0: i32) -> (i32, i32, i32) {
    %c0_i32 = arith.constant 0 : i32
    %c0_i32_0 = arith.constant 0 : i32
    %c0_i32_1 = arith.constant 0 : i32
    return %arg0, %c0_i32, %c0_i32_0 : i32, i32, i32
  }
  func.func @transform_1(%arg0: i32) -> (i32, i32, i32) {
    %c0_i32 = arith.constant 0 : i32
    %c0_i32_0 = arith.constant 0 : i32
    %c0_i32_1 = arith.constant 0 : i32
    return %arg0, %c0_i32, %c0_i32_0 : i32, i32, i32
  }
  func.func @transform_2(%arg0: i32) -> (i32, i32) {
    %c0_i32 = arith.constant 0 : i32
    %c0_i32_0 = arith.constant 0 : i32
    %c0_i32_1 = arith.constant 0 : i32
    return %c0_i32, %c0_i32_0 : i32, i32
  }
  func.func @transform_3(%arg0: i32) -> (i32, i32) {
    %c0_i32 = arith.constant 0 : i32
    %c0_i32_0 = arith.constant 0 : i32
    %c0_i32_1 = arith.constant 0 : i32
    return %c0_i32, %c0_i32_0 : i32, i32
  }
  func.func @transform_4(%arg0: i32) -> (i32, i32) {
    %c0_i32 = arith.constant 0 : i32
    %c0_i32_0 = arith.constant 0 : i32
    %c0_i32_1 = arith.constant 0 : i32
    return %c0_i32, %c0_i32_0 : i32, i32
  }
  func.func @transform_5(%arg0: i32) -> (i32, i32) {
    %c0_i32 = arith.constant 0 : i32
    %c0_i32_0 = arith.constant 0 : i32
    %c0_i32_1 = arith.constant 0 : i32
    return %c0_i32, %c0_i32_0 : i32, i32
  }
  func.func @transform_6(%arg0: i32) -> (i32, i32) {
    %c0_i32 = arith.constant 0 : i32
    %c0_i32_0 = arith.constant 0 : i32
    %c0_i32_1 = arith.constant 0 : i32
    return %c0_i32, %c0_i32_0 : i32, i32
  }
  func.func @transform_7(%arg0: i32) -> (i32, i32) {
    %c0_i32 = arith.constant 0 : i32
    %c0_i32_0 = arith.constant 0 : i32
    %c0_i32_1 = arith.constant 0 : i32
    return %c0_i32, %c0_i32_0 : i32, i32
  }
  func.func @transform_8(%arg0: i32) -> (i32, i32, i32) {
    %c0_i32 = arith.constant 0 : i32
    %c0_i32_0 = arith.constant 0 : i32
    %c0_i32_1 = arith.constant 0 : i32
    return %arg0, %c0_i32, %c0_i32_0 : i32, i32, i32
  }
}

</mosaic_0001>

<llo_original>
// kernel: tpu_custom_call.1
$region0: #{tpu_custom_call.1}
  #allocation0 [shape = 'u32[]', space=smem, size = 0x4, offset = 0x4, fixed_abs, tag = 'smem constant byte address 0x4 - core index']
  #allocation1 [shape = 'u32[144,128]{1,0:T(1,128)}', space=vmem, size = 0x12000, scoped, tag = 'internal scratch']
  #allocation2 [shape = 'f32[8,32]{1,0:T(8,128)}', space=vmem, size = 0x1000, scoped, tag = 'scratch operand']
  %s0 = inlined_call_operand.hbm [shape: f32[2,8,32], index: 0, kind: input, shape index: {}]
  %s1 = inlined_call_operand.hbm [shape: f32[2,16,32], index: 1, kind: input, shape index: {}]
  %s2 = inlined_call_operand.hbm [shape: f32[32,32], index: 2, kind: input, shape index: {}]
  %s3 = inlined_call_operand.vmem [shape: f32[1,32], index: 3, kind: input, shape index: {}]
  %s4 = inlined_call_operand.hbm [shape: f32[32,64], index: 4, kind: input, shape index: {}]
  %s5 = inlined_call_operand.vmem [shape: f32[1,64], index: 5, kind: input, shape index: {}]
  %s6 = inlined_call_operand.hbm [shape: f32[32,32], index: 6, kind: input, shape index: {}]
  %s7 = inlined_call_operand.vmem [shape: f32[1,32], index: 7, kind: input, shape index: {}]
  %s8 = inlined_call_operand.hbm [shape: f32[2,8,32], index: 8, kind: output, shape index: {}]
  %s9 = sld [smem:[#allocation0]]
  $region85: #{tpu_custom_call.1} parent=0
    _
  %s11 = ssub.s32 1, %s9
  %s12 = scalar_select 0, %s11, %s9
  $region1: #{tpu_custom_call.1} parent=0
    #allocation3 [shape = 'u8[8192]{0}', space=vmem, size = 0x2000, scoped, tag = 'input window, operand 0']
    #allocation4 [shape = 's32[2]{0}', space=sflag, size = 0x8, scoped, tag = 'scoped memory for tpu_custom_call.1']
    #allocation5 [shape = 's32[2]{0}', space=sflag, size = 0x8, scoped, tag = 'scoped memory for tpu_custom_call.1']
    #allocation6 [shape = 'u8[16384]{0}', space=vmem, size = 0x4000, scoped, tag = 'input window, operand 1']
    #allocation7 [shape = 's32[2]{0}', space=sflag, size = 0x8, scoped, tag = 'scoped memory for tpu_custom_call.1']
    #allocation8 [shape = 'u8[16384]{0}', space=vmem, size = 0x4000, scoped, tag = 'input window, operand 2, single buffered']
    #allocation9 [shape = 'u8[16384]{0}', space=vmem, size = 0x4000, scoped, tag = 'input window, operand 4, single buffered']
    #allocation10 [shape = 's32[1]{0}', space=sflag, size = 0x4, scoped, tag = 'scoped memory for tpu_custom_call.1']
    #allocation11 [shape = 'u8[16384]{0}', space=vmem, size = 0x4000, scoped, tag = 'input window, operand 6, single buffered']
    #allocation12 [shape = 'u8[8192]{0}', space=vmem, size = 0x2000, scoped, tag = 'output window, operand 0']
    %13 = vsyncpa [#allocation4], 0
    %s14 = scalar_lea.sflag [#allocation4], 1
    %15 = vsyncpa %s14, 0
    %16 = vsyncpa [#allocation7], 0
    %s17 = scalar_lea.sflag [#allocation7], 1
    %18 = vsyncpa %s17, 0
    %19 = vsyncpa [#allocation10], 0
    %20 = vsyncpa [#allocation5], 0
    %s21 = scalar_lea.sflag [#allocation5], 1
    %22 = vsyncpa %s21, 0
    loop: start=0, step=1, limit=4
    $region2: #{tpu_custom_call.1} parent=1 // loop_pre_header
      _
    $region3: #{tpu_custom_call.1} parent=1 // loop_header
      %s24 = sphi 0, %s28
      %p25 = scmp.ge.s32.totalorder %s24, 4
      %s34 = sphi 0, %s36
      %s37 = sphi 0, %s34
      %s38 = sphi 0, %s37
      %s54 = sphi 0, %s38
      %s60 = sphi 0, %s62
      %s63 = sphi 0, %s60
      %s64 = sphi 0, %s63
      %s80 = sphi 0, %s64
      %s84 = sphi 0, %s84
      %s86 = sphi 0, %s84
      %s87 = sphi 0, %s86
      %s101 = sphi 0, %s87
      %s105 = sphi 0, %s105
      %s107 = sphi 0, %s105
      %s108 = sphi 0, %s107
      %s122 = sphi 0, %s108
      %s126 = sphi 0, %s126
      %s128 = sphi 0, %s126
      %s129 = sphi 0, %s128
      %s143 = sphi 0, %s129
      %s147 = sphi 0, %s147
      %s149 = sphi 0, %s147
      %s150 = sphi 0, %s149
      %s164 = sphi 0, %s150
      %s168 = sphi 0, %s168
      %s170 = sphi 0, %s168
      %s171 = sphi 0, %s170
      %s185 = sphi 0, %s171
      %s189 = sphi 0, %s189
      %s191 = sphi 0, %s189
      %s192 = sphi 0, %s191
      %s206 = sphi 0, %s192
      %s212 = sphi 0, %s214
      %s215 = sphi 0, %s212
      %s216 = sphi 0, %s215
      %s232 = sphi 0, %s216
    $region4: #{tpu_custom_call.1} parent=1 // loop_header_branch
      %27 = sbr.rel (%p25) target = $region8
    $region5: #{tpu_custom_call.1} parent=1 // loop_body
      %s29 = ssub.s32 %s24, 1
      %s30 = ssub.s32 %s24, 2
      %s31 = sadd.s32 %s24, 1
      %s32 = ssub.s32 %s24, %s31
      %p33 = scmp.eq.s32.totalorder %s32, 0
      %s35 = sadd.s32 %s34, 1
      %s36 = scalar_select %p33, %s34, %s35
      %p39 = pneg %p33
      %p40 = scmp.eq.s32.totalorder %s24, 1
      %p41 = por %p39, %p40
      %p42 = scmp.ne.s32.totalorder %s34, %s37
      %p43 = scmp.eq.s32.totalorder %s24, 0
      %p44 = por %p42, %p43
      %p45 = scmp.ne.s32.totalorder %s34, %s37
      %p46 = scmp.eq.s32.totalorder %s29, 1
      %p47 = por %p45, %p46
      %p48 = scmp.ne.s32.totalorder %s37, %s38
      %p49 = scmp.eq.s32.totalorder %s29, 0
      %p50 = por %p48, %p49
      %p51 = scmp.ne.s32.totalorder %s37, %s38
      %p52 = scmp.eq.s32.totalorder %s30, 1
      %p53 = por %p51, %p52
      %p55 = scmp.ne.s32.totalorder %s38, %s54
      %p56 = scmp.eq.s32.totalorder %s30, 0
      %p57 = por %p55, %p56
      %s58 = ssub.s32 %s24, %s31
      %p59 = scmp.eq.s32.totalorder %s58, 0
      %s61 = sadd.s32 %s60, 1
      %s62 = scalar_select %p59, %s60, %s61
      %p65 = pneg %p59
      %p66 = scmp.eq.s32.totalorder %s24, 1
      %p67 = por %p65, %p66
      %p68 = scmp.ne.s32.totalorder %s60, %s63
      %p69 = scmp.eq.s32.totalorder %s24, 0
      %p70 = por %p68, %p69
      %p71 = scmp.ne.s32.totalorder %s60, %s63
      %p72 = scmp.eq.s32.totalorder %s29, 1
      %p73 = por %p71, %p72
      %p74 = scmp.ne.s32.totalorder %s63, %s64
      %p75 = scmp.eq.s32.totalorder %s29, 0
      %p76 = por %p74, %p75
      %p77 = scmp.ne.s32.totalorder %s63, %s64
      %p78 = scmp.eq.s32.totalorder %s30, 1
      %p79 = por %p77, %p78
      %p81 = scmp.ne.s32.totalorder %s64, %s80
      %p82 = scmp.eq.s32.totalorder %s30, 0
      %p83 = por %p81, %p82
      %s85 = sadd.s32 %s84, 1
      %p88 = scmp.eq.s32.totalorder %s24, 1
      %p89 = scmp.ne.s32.totalorder %s84, %s86
      %p90 = scmp.eq.s32.totalorder %s24, 0
      %p91 = por %p89, %p90
      %p92 = scmp.ne.s32.totalorder %s84, %s86
      %p93 = scmp.eq.s32.totalorder %s29, 1
      %p94 = por %p92, %p93
      %p95 = scmp.ne.s32.totalorder %s86, %s87
      %p96 = scmp.eq.s32.totalorder %s29, 0
      %p97 = por %p95, %p96
      %p98 = scmp.ne.s32.totalorder %s86, %s87
      %p99 = scmp.eq.s32.totalorder %s30, 1
      %p100 = por %p98, %p99
      %p102 = scmp.ne.s32.totalorder %s87, %s101
      %p103 = scmp.eq.s32.totalorder %s30, 0
      %p104 = por %p102, %p103
      %s106 = sadd.s32 %s105, 1
      %p109 = scmp.eq.s32.totalorder %s24, 1
      %p110 = scmp.ne.s32.totalorder %s105, %s107
      %p111 = scmp.eq.s32.totalorder %s24, 0
      %p112 = por %p110, %p111
      %p113 = scmp.ne.s32.totalorder %s105, %s107
      %p114 = scmp.eq.s32.totalorder %s29, 1
      %p115 = por %p113, %p114
      %p116 = scmp.ne.s32.totalorder %s107, %s108
      %p117 = scmp.eq.s32.totalorder %s29, 0
      %p118 = por %p116, %p117
      %p119 = scmp.ne.s32.totalorder %s107, %s108
      %p120 = scmp.eq.s32.totalorder %s30, 1
      %p121 = por %p119, %p120
      %p123 = scmp.ne.s32.totalorder %s108, %s122
      %p124 = scmp.eq.s32.totalorder %s30, 0
      %p125 = por %p123, %p124
      %s127 = sadd.s32 %s126, 1
      %p130 = scmp.eq.s32.totalorder %s24, 1
      %p131 = scmp.ne.s32.totalorder %s126, %s128
      %p132 = scmp.eq.s32.totalorder %s24, 0
      %p133 = por %p131, %p132
      %p134 = scmp.ne.s32.totalorder %s126, %s128
      %p135 = scmp.eq.s32.totalorder %s29, 1
      %p136 = por %p134, %p135
      %p137 = scmp.ne.s32.totalorder %s128, %s129
      %p138 = scmp.eq.s32.totalorder %s29, 0
      %p139 = por %p137, %p138
      %p140 = scmp.ne.s32.totalorder %s128, %s129
      %p141 = scmp.eq.s32.totalorder %s30, 1
      %p142 = por %p140, %p141
      %p144 = scmp.ne.s32.totalorder %s129, %s143
      %p145 = scmp.eq.s32.totalorder %s30, 0
      %p146 = por %p144, %p145
      %s148 = sadd.s32 %s147, 1
      %p151 = scmp.eq.s32.totalorder %s24, 1
      %p152 = scmp.ne.s32.totalorder %s147, %s149
      %p153 = scmp.eq.s32.totalorder %s24, 0
      %p154 = por %p152, %p153
      %p155 = scmp.ne.s32.totalorder %s147, %s149
      %p156 = scmp.eq.s32.totalorder %s29, 1
      %p157 = por %p155, %p156
      %p158 = scmp.ne.s32.totalorder %s149, %s150
      %p159 = scmp.eq.s32.totalorder %s29, 0
      %p160 = por %p158, %p159
      %p161 = scmp.ne.s32.totalorder %s149, %s150
      %p162 = scmp.eq.s32.totalorder %s30, 1
      %p163 = por %p161, %p162
      %p165 = scmp.ne.s32.totalorder %s150, %s164
      %p166 = scmp.eq.s32.totalorder %s30, 0
      %p167 = por %p165, %p166
      %s169 = sadd.s32 %s168, 1
      %p172 = scmp.eq.s32.totalorder %s24, 1
      %p173 = scmp.ne.s32.totalorder %s168, %s170
      %p174 = scmp.eq.s32.totalorder %s24, 0
      %p175 = por %p173, %p174
      %p176 = scmp.ne.s32.totalorder %s168, %s170
      %p177 = scmp.eq.s32.totalorder %s29, 1
      %p178 = por %p176, %p177
      %p179 = scmp.ne.s32.totalorder %s170, %s171
      %p180 = scmp.eq.s32.totalorder %s29, 0
      %p181 = por %p179, %p180
      %p182 = scmp.ne.s32.totalorder %s170, %s171
      %p183 = scmp.eq.s32.totalorder %s30, 1
      %p184 = por %p182, %p183
      %p186 = scmp.ne.s32.totalorder %s171, %s185
      %p187 = scmp.eq.s32.totalorder %s30, 0
      %p188 = por %p186, %p187
      %s190 = sadd.s32 %s189, 1
      %p193 = scmp.eq.s32.totalorder %s24, 1
      %p194 = scmp.ne.s32.totalorder %s189, %s191
      %p195 = scmp.eq.s32.totalorder %s24, 0
      %p196 = por %p194, %p195
      %p197 = scmp.ne.s32.totalorder %s189, %s191
      %p198 = scmp.eq.s32.totalorder %s29, 1
      %p199 = por %p197, %p198
      %p200 = scmp.ne.s32.totalorder %s191, %s192
      %p201 = scmp.eq.s32.totalorder %s29, 0
      %p202 = por %p200, %p201
      %p203 = scmp.ne.s32.totalorder %s191, %s192
      %p204 = scmp.eq.s32.totalorder %s30, 1
      %p205 = por %p203, %p204
      %p207 = scmp.ne.s32.totalorder %s192, %s206
      %p208 = scmp.eq.s32.totalorder %s30, 0
      %p209 = por %p207, %p208
      %s210 = ssub.s32 %s24, %s31
      %p211 = scmp.eq.s32.totalorder %s210, 0
      %s213 = sadd.s32 %s212, 1
      %s214 = scalar_select %p211, %s212, %s213
      %p217 = pneg %p211
      %p218 = scmp.eq.s32.totalorder %s24, 1
      %p219 = por %p217, %p218
      %p220 = scmp.ne.s32.totalorder %s212, %s215
      %p221 = scmp.eq.s32.totalorder %s24, 0
      %p222 = por %p220, %p221
      %p223 = scmp.ne.s32.totalorder %s212, %s215
      %p224 = scmp.eq.s32.totalorder %s29, 1
      %p225 = por %p223, %p224
      %p226 = scmp.ne.s32.totalorder %s215, %s216
      %p227 = scmp.eq.s32.totalorder %s29, 0
      %p228 = por %p226, %p227
      %p229 = scmp.ne.s32.totalorder %s215, %s216
      %p230 = scmp.eq.s32.totalorder %s30, 1
      %p231 = por %p229, %p230
      %p233 = scmp.ne.s32.totalorder %s216, %s232
      %p234 = scmp.eq.s32.totalorder %s30, 0
      %p235 = por %p233, %p234
      %p236 = scmp.le.s32.totalorder 1, %s24
      %p237 = scmp.lt.s32.totalorder %s24, 3
      %p238 = pnand %p236, %p237
      %p239 = pneg %p238
      // Predicated region
      $region9: #{tpu_custom_call.1} parent=5 // pred_check
        _
      $region10: #{tpu_custom_call.1} parent=5 // pred_check_branch
        %241 = sbr.rel (%p238) target = $region12
      $region11: #{tpu_custom_call.1} parent=5 // pred_region
        %s242 = ssub.s32 %s24, 1
        // Predicated region
        $region13: #{tpu_custom_call.1} parent=11 // pred_check
          %p243 = pneg %p97
        $region14: #{tpu_custom_call.1} parent=11 // pred_check_branch
          %245 = sbr.rel (%p243) target = $region16
        $region15: #{tpu_custom_call.1} parent=11 // pred_region
          %s247 = ssub.s32 512, 512
          %248 = vsyncadd [#allocation7], %s247
          %s249 = sshll.u32 [#allocation8], 4
          %s250 = int_to_ptr.vmem [resolvable:$true] %s249
          %255 = dma.hbm_to_vmem [thread:$0]  %s2, 512, %s250, [#allocation7], 128, 128, 8
        $region16: #{tpu_custom_call.1} parent=11 // pred_fallthru
          _
        // Predicated region
        $region17: #{tpu_custom_call.1} parent=11 // pred_check
          %p256 = pneg %p118
        $region18: #{tpu_custom_call.1} parent=11 // pred_check_branch
          %258 = sbr.rel (%p256) target = $region20
        $region19: #{tpu_custom_call.1} parent=11 // pred_region
          _
        $region20: #{tpu_custom_call.1} parent=11 // pred_fallthru
          _
        // Predicated region
        $region21: #{tpu_custom_call.1} parent=11 // pred_check
          %p259 = pneg %p139
        $region22: #{tpu_custom_call.1} parent=11 // pred_check_branch
          %261 = sbr.rel (%p259) target = $region24
        $region23: #{tpu_custom_call.1} parent=11 // pred_region
          %s263 = ssub.s32 512, 512
          %264 = vsyncadd [#allocation10], %s263
          %s265 = sshll.u32 [#allocation9], 4
          %s266 = int_to_ptr.vmem [resolvable:$true] %s265
          %271 = dma.hbm_to_vmem [thread:$0]  %s4, 512, %s266, [#allocation10], 128, 128, 8
        $region24: #{tpu_custom_call.1} parent=11 // pred_fallthru
          _
        // Predicated region
        $region25: #{tpu_custom_call.1} parent=11 // pred_check
          %p272 = pneg %p160
        $region26: #{tpu_custom_call.1} parent=11 // pred_check_branch
          %274 = sbr.rel (%p272) target = $region28
        $region27: #{tpu_custom_call.1} parent=11 // pred_region
          _
        $region28: #{tpu_custom_call.1} parent=11 // pred_fallthru
          _
        // Predicated region
        $region29: #{tpu_custom_call.1} parent=11 // pred_check
          %p275 = pneg %p181
        $region30: #{tpu_custom_call.1} parent=11 // pred_check_branch
          %277 = sbr.rel (%p275) target = $region32
        $region31: #{tpu_custom_call.1} parent=11 // pred_region
          %s279 = ssub.s32 512, 512
          %280 = vsyncadd [#allocation10], %s279
          %s281 = sshll.u32 [#allocation11], 4
          %s282 = int_to_ptr.vmem [resolvable:$true] %s281
          %287 = dma.hbm_to_vmem [thread:$0]  %s6, 512, %s282, [#allocation10], 128, 128, 8
        $region32: #{tpu_custom_call.1} parent=11 // pred_fallthru
          _
        // Predicated region
        $region33: #{tpu_custom_call.1} parent=11 // pred_check
          %p288 = pneg %p202
        $region34: #{tpu_custom_call.1} parent=11 // pred_check_branch
          %290 = sbr.rel (%p288) target = $region36
        $region35: #{tpu_custom_call.1} parent=11 // pred_region
          _
        $region36: #{tpu_custom_call.1} parent=11 // pred_fallthru
          _
      $region12: #{tpu_custom_call.1} parent=5 // pred_fallthru
        _
      %p291 = scmp.lt.s32.totalorder %s24, 2
      // Predicated region
      $region37: #{tpu_custom_call.1} parent=5 // pred_check
        %p292 = pneg %p291
      $region38: #{tpu_custom_call.1} parent=5 // pred_check_branch
        %294 = sbr.rel (%p292) target = $region40
      $region39: #{tpu_custom_call.1} parent=5 // pred_region
        // Predicated region
        $region41: #{tpu_custom_call.1} parent=39 // pred_check
          %p295 = pneg %p44
        $region42: #{tpu_custom_call.1} parent=39 // pred_check_branch
          %297 = sbr.rel (%p295) target = $region44
        $region43: #{tpu_custom_call.1} parent=39 // pred_region
          %s298 = sand.u32 %s34, 1
          %s299 = scalar_lea.sflag [#allocation4], %s298
          %s300 = sand.u32 %s34, 1
          %s301 = smul.addr %s300, 8
          %s302 = scalar_lea.vmem [#allocation3], %s301
          %s304 = ssub.s32 128, 128
          %305 = vsyncadd %s299, %s304
          %s306 = smul.addr %s24, 128
          %s307 = scalar_lea.hbm %s0, %s306
          %s309 = sshll.u32 %s302, 4
          %s310 = int_to_ptr.vmem [resolvable:$true] %s309
          %312 = dma.hbm_to_vmem [thread:$0]  %s307, 128, %s310, %s299
        $region44: #{tpu_custom_call.1} parent=39 // pred_fallthru
          _
        // Predicated region
        $region45: #{tpu_custom_call.1} parent=39 // pred_check
          %p313 = pneg %p70
        $region46: #{tpu_custom_call.1} parent=39 // pred_check_branch
          %315 = sbr.rel (%p313) target = $region48
        $region47: #{tpu_custom_call.1} parent=39 // pred_region
          %s316 = sand.u32 %s24, 1
          %s317 = scalar_lea.sflag [#allocation7], %s316
          %s318 = sand.u32 %s60, 1
          %s319 = smul.addr %s318, 16
          %s320 = scalar_lea.vmem [#allocation6], %s319
          %s322 = ssub.s32 256, 256
          %323 = vsyncadd %s317, %s322
          %s324 = smul.addr %s24, 2
          %s325 = smul.addr %s324, 128
          %s326 = scalar_lea.hbm %s1, %s325
          %s327 = sshll.u32 %s320, 4
          %s328 = int_to_ptr.vmem [resolvable:$true] %s327
          %333 = dma.hbm_to_vmem [thread:$0]  %s326, 256, %s328, %s317, 128, 128, 8
        $region48: #{tpu_custom_call.1} parent=39 // pred_fallthru
          _
      $region40: #{tpu_custom_call.1} parent=5 // pred_fallthru
        _
      %p334 = scmp.le.s32.totalorder 1, %s24
      %p335 = scmp.lt.s32.totalorder %s24, 3
      %p336 = pnand %p334, %p335
      %p337 = pneg %p336
      // Predicated region
      $region49: #{tpu_custom_call.1} parent=5 // pred_check
        _
      $region50: #{tpu_custom_call.1} parent=5 // pred_check_branch
        %339 = sbr.rel (%p336) target = $region52
      $region51: #{tpu_custom_call.1} parent=5 // pred_region
        %s340 = ssub.s32 %s24, 1
        %s341 = sand.u32 %s37, 1
        %s342 = scalar_lea.sflag [#allocation4], %s341
        %s343 = sand.u32 %s37, 1
        %s344 = smul.addr %s343, 8
        %s345 = scalar_lea.vmem [#allocation3], %s344
        // Predicated region
        $region53: #{tpu_custom_call.1} parent=51 // pred_check
          %p346 = pneg %p50
        $region54: #{tpu_custom_call.1} parent=51 // pred_check_branch
          %348 = sbr.rel (%p346) target = $region56
        $region55: #{tpu_custom_call.1} parent=51 // pred_region
          %349 = dma.done %s342, 128
        $region56: #{tpu_custom_call.1} parent=51 // pred_fallthru
          _
        %s350 = sand.u32 %s29, 1
        %s351 = scalar_lea.sflag [#allocation7], %s350
        %s352 = sand.u32 %s63, 1
        %s353 = smul.addr %s352, 16
        %s354 = scalar_lea.vmem [#allocation6], %s353
        // Predicated region
        $region57: #{tpu_custom_call.1} parent=51 // pred_check
          %p355 = pneg %p76
        $region58: #{tpu_custom_call.1} parent=51 // pred_check_branch
          %357 = sbr.rel (%p355) target = $region60
        $region59: #{tpu_custom_call.1} parent=51 // pred_region
          %358 = dma.done %s351, 256
        $region60: #{tpu_custom_call.1} parent=51 // pred_fallthru
          _
        // Predicated region
        $region61: #{tpu_custom_call.1} parent=51 // pred_check
          %p359 = pneg %p97
        $region62: #{tpu_custom_call.1} parent=51 // pred_check_branch
          %361 = sbr.rel (%p359) target = $region64
        $region63: #{tpu_custom_call.1} parent=51 // pred_region
          %362 = dma.done [#allocation7], 512
        $region64: #{tpu_custom_call.1} parent=51 // pred_fallthru
          _
        // Predicated region
        $region65: #{tpu_custom_call.1} parent=51 // pred_check
          %p363 = pneg %p139
        $region66: #{tpu_custom_call.1} parent=51 // pred_check_branch
          %365 = sbr.rel (%p363) target = $region68
        $region67: #{tpu_custom_call.1} parent=51 // pred_region
          %366 = dma.done [#allocation10], 512
        $region68: #{tpu_custom_call.1} parent=51 // pred_fallthru
          _
        // Predicated region
        $region69: #{tpu_custom_call.1} parent=51 // pred_check
          %p367 = pneg %p181
        $region70: #{tpu_custom_call.1} parent=51 // pred_check_branch
          %369 = sbr.rel (%p367) target = $region72
        $region71: #{tpu_custom_call.1} parent=51 // pred_region
          %370 = dma.done [#allocation10], 512
        $region72: #{tpu_custom_call.1} parent=51 // pred_fallthru
          _
        %s371 = sand.u32 %s37, 1
        %s372 = scalar_lea.sflag [#allocation4], %s371
        %s373 = sand.u32 %s37, 1
        %s374 = smul.addr %s373, 8
        %s375 = scalar_lea.vmem [#allocation3], %s374
        %p376 = pneg %p50
        %p377 = pneg %p47
        %s378 = sand.u32 %s29, 1
        %s379 = scalar_lea.sflag [#allocation7], %s378
        %s380 = sand.u32 %s63, 1
        %s381 = smul.addr %s380, 16
        %s382 = scalar_lea.vmem [#allocation6], %s381
        %p383 = pneg %p76
        %p384 = pneg %p73
        %p385 = pneg %p97
        %p386 = pneg %p94
        %p387 = pneg %p118
        %p388 = pneg %p115
        %p389 = pneg %p139
        %p390 = pneg %p136
        %p391 = pneg %p160
        %p392 = pneg %p157
        %p393 = pneg %p181
        %p394 = pneg %p178
        %p395 = pneg %p202
        %p396 = pneg %p199
        %p397 = pneg %p228
        %p398 = pneg %p225
        %s399 = sand.u32 %s215, 1
        %s400 = scalar_lea.sflag [#allocation5], %s399
        %s401 = sand.u32 %s215, 1
        %s402 = smul.addr %s401, 8
        %s403 = scalar_lea.vmem [#allocation12], %s402
        %v404 = vld [vmem:[%s345] sm:$0xff]
        %v405 = vld [vmem:[%s354] sm:$0xff]
        %v406 = vld [vmem:[%s354 + $0x8] sm:$0xff]
        %v407 = vld [vmem:[#allocation8] sm:$0xff]
        %v408 = vld [vmem:[#allocation8 + $0x8] sm:$0xff]
        %v409 = vld [vmem:[#allocation8 + $0x10] sm:$0xff]
        %v410 = vld [vmem:[#allocation8 + $0x18] sm:$0xff]
        %v411 = vld [vmem:[%s3] sm:$0x1]
        %v413 = vlaneseq
        %v414 = vshrl.u32 %v413, 7
        %v415 = vsub.s32 0, %v414
        %v416 = vrot.slane %v411, %v415
        %vm418 = vcmask 261120
        %v420 = vsel %vm418, %v404, 0
        %422 = vmatprep.subr.mxu0 0.0
        %423 = vmatpush1.msra.mxu0 0.0
        %424 = vmatprep.subr.mxu0 0.0
        %425 = vmatpush1.msra.mxu0 0.0
        %426 = vmatprep.subr.mxu0 0.0
        %427 = vmatpush1.msra.mxu0 0.0
        %428 = vmatprep.subr.mxu0 0.0
        %429 = vmatpush1.msra.mxu0 0.0
        %430 = vmatprep.subr.mxu0 0.0
        %431 = vmatpush1.msra.mxu0 0.0
        %432 = vmatprep.subr.mxu0 0.0
        %433 = vmatpush1.msra.mxu0 0.0
        %434 = vmatprep.subr.mxu0 0.0
        %435 = vmatpush1.msra.mxu0 0.0
        %436 = vmatprep.subr.mxu0 0.0
        %437 = vmatpush1.msra.mxu0 0.0
        %438 = vmatprep.subr.mxu0 0.0
        %439 = vmatpush1.msra.mxu0 0.0
        %440 = vmatprep.subr.mxu0 0.0
        %441 = vmatpush1.msra.mxu0 0.0
        %442 = vmatprep.subr.mxu0 0.0
        %443 = vmatpush1.msra.mxu0 0.0
        %444 = vmatprep.subr.mxu0 0.0
        %445 = vmatpush1.msra.mxu0 0.0
        %446 = vmatprep.subr.mxu0 0.0
        %447 = vmatpush1.msra.mxu0 %v410
        %448 = vmatprep.subr.mxu0 0.0
        %449 = vmatpush1.msra.mxu0 %v409
        %450 = vmatprep.subr.mxu0 0.0
        %451 = vmatpush1.msra.mxu0 %v408
        %452 = vmatprep.subr.mxu0 0.0
        %453 = vmatpush1.msra.mxu0 %v407
        %454 = vmatprep.subr.mxu0 0.0
        %455 = vmatpush2.msra.mxu0 0.0
        %456 = vmatprep.subr.mxu0 0.0
        %457 = vmatpush2.msra.mxu0 0.0
        %458 = vmatprep.subr.mxu0 0.0
        %459 = vmatpush2.msra.mxu0 0.0
        %460 = vmatprep.subr.mxu0 0.0
        %461 = vmatpush2.msra.mxu0 0.0
        %462 = vmatprep.subr.mxu0 0.0
        %463 = vmatpush2.msra.mxu0 0.0
        %464 = vmatprep.subr.mxu0 0.0
        %465 = vmatpush2.msra.mxu0 0.0
        %466 = vmatprep.subr.mxu0 0.0
        %467 = vmatpush2.msra.mxu0 0.0
        %468 = vmatprep.subr.mxu0 0.0
        %469 = vmatpush2.msra.mxu0 0.0
        %470 = vmatprep.subr.mxu0 0.0
        %471 = vmatpush2.msra.mxu0 0.0
        %472 = vmatprep.subr.mxu0 0.0
        %473 = vmatpush2.msra.mxu0 0.0
        %474 = vmatprep.subr.mxu0 0.0
        %475 = vmatpush2.msra.mxu0 0.0
        %476 = vmatprep.subr.mxu0 0.0
        %477 = vmatpush2.msra.mxu0 0.0
        %478 = vmatprep.subr.mxu0 0.0
        %479 = vmatpush2.msra.mxu0 0.0
        %480 = vmatprep.subr.mxu0 0.0
        %481 = vmatpush2.msra.mxu0 0.0
        %482 = vmatprep.subr.mxu0 0.0
        %483 = vmatpush2.msra.mxu0 0.0
        %484 = vmatprep.subr.mxu0 0.0
        %485 = vmatpush2.msra.mxu0 0.0
        %486 = vmatprep.mubr.f32.mxu0 0.0
        %487 = vmatmul.mubr.f32.gmra.mxu0 %v420
        %v488 = vpop.f32.mrf.mxu0
        %v489 = vadd.f32 %v416, %v488
        %v490 = vpop.f32.mrf.mxu0
        %491 = vdwg.mxu0
        %v492 = vmul.f32 %v489, 0.35355338
        %v493 = vld [vmem:[#allocation9] sm:$0xff]
        %v494 = vld [vmem:[#allocation9 + $0x8] sm:$0xff]
        %v495 = vld [vmem:[#allocation9 + $0x10] sm:$0xff]
        %v496 = vld [vmem:[#allocation9 + $0x18] sm:$0xff]
        %v497 = vld [vmem:[%s5] sm:$0x1]
        %v499 = vlaneseq
        %v500 = vshrl.u32 %v499, 7
        %v501 = vsub.s32 0, %v500
        %v502 = vrot.slane %v497, %v501
        %v505 = vsel %vm418, %v405, 0
        %v508 = vsel %vm418, %v406, 0
        %510 = vmatprep.subr.mxu0 0.0
        %511 = vmatpush1.msra.mxu0 0.0
        %512 = vmatprep.subr.mxu0 0.0
        %513 = vmatpush1.msra.mxu0 0.0
        %514 = vmatprep.subr.mxu0 0.0
        %515 = vmatpush1.msra.mxu0 0.0
        %516 = vmatprep.subr.mxu0 0.0
        %517 = vmatpush1.msra.mxu0 0.0
        %518 = vmatprep.subr.mxu0 0.0
        %519 = vmatpush1.msra.mxu0 0.0
        %520 = vmatprep.subr.mxu0 0.0
        %521 = vmatpush1.msra.mxu0 0.0
        %522 = vmatprep.subr.mxu0 0.0
        %523 = vmatpush1.msra.mxu0 0.0
        %524 = vmatprep.subr.mxu0 0.0
        %525 = vmatpush1.msra.mxu0 0.0
        %526 = vmatprep.subr.mxu0 0.0
        %527 = vmatpush1.msra.mxu0 0.0
        %528 = vmatprep.subr.mxu0 0.0
        %529 = vmatpush1.msra.mxu0 0.0
        %530 = vmatprep.subr.mxu0 0.0
        %531 = vmatpush1.msra.mxu0 0.0
        %532 = vmatprep.subr.mxu0 0.0
        %533 = vmatpush1.msra.mxu0 0.0
        %534 = vmatprep.subr.mxu0 0.0
        %535 = vmatpush1.msra.mxu0 %v496
        %536 = vmatprep.subr.mxu0 0.0
        %537 = vmatpush1.msra.mxu0 %v495
        %538 = vmatprep.subr.mxu0 0.0
        %539 = vmatpush1.msra.mxu0 %v494
        %540 = vmatprep.subr.mxu0 0.0
        %541 = vmatpush1.msra.mxu0 %v493
        %542 = vmatprep.subr.mxu0 0.0
        %543 = vmatpush2.msra.mxu0 0.0
        %544 = vmatprep.subr.mxu0 0.0
        %545 = vmatpush2.msra.mxu0 0.0
        %546 = vmatprep.subr.mxu0 0.0
        %547 = vmatpush2.msra.mxu0 0.0
        %548 = vmatprep.subr.mxu0 0.0
        %549 = vmatpush2.msra.mxu0 0.0
        %550 = vmatprep.subr.mxu0 0.0
        %551 = vmatpush2.msra.mxu0 0.0
        %552 = vmatprep.subr.mxu0 0.0
        %553 = vmatpush2.msra.mxu0 0.0
        %554 = vmatprep.subr.mxu0 0.0
        %555 = vmatpush2.msra.mxu0 0.0
        %556 = vmatprep.subr.mxu0 0.0
        %557 = vmatpush2.msra.mxu0 0.0
        %558 = vmatprep.subr.mxu0 0.0
        %559 = vmatpush2.msra.mxu0 0.0
        %560 = vmatprep.subr.mxu0 0.0
        %561 = vmatpush2.msra.mxu0 0.0
        %562 = vmatprep.subr.mxu0 0.0
        %563 = vmatpush2.msra.mxu0 0.0
        %564 = vmatprep.subr.mxu0 0.0
        %565 = vmatpush2.msra.mxu0 0.0
        %566 = vmatprep.subr.mxu0 0.0
        %567 = vmatpush2.msra.mxu0 0.0
        %568 = vmatprep.subr.mxu0 0.0
        %569 = vmatpush2.msra.mxu0 0.0
        %570 = vmatprep.subr.mxu0 0.0
        %571 = vmatpush2.msra.mxu0 0.0
        %572 = vmatprep.subr.mxu0 0.0
        %573 = vmatpush2.msra.mxu0 0.0
        %574 = vmatprep.mubr.f32.mxu0 0.0
        %575 = vmatmul.mubr.f32.gmra.mxu0 %v505
        %v576 = vpop.f32.mrf.mxu0
        %v577 = vadd.f32 %v502, %v576
        %v578 = vpop.f32.mrf.mxu0
        %579 = vmatprep.mubr.f32.mxu0 0.0
        %580 = vmatmul.mubr.f32.gmra.mxu0 %v508
        %v581 = vpop.f32.mrf.mxu0
        %v582 = vadd.f32 %v502, %v581
        %v583 = vpop.f32.mrf.mxu0
        %584 = vdwg.mxu0
        %vm585 = vcmask 64512
        %v587 = vsel %vm585, %v492, 0
        %v590 = vsel %vm585, %v577, 0
        %v593 = vsel %vm585, %v582, 0
        %595 = vmatprep.subr.mxu0 0.0
        %596 = vmatpush1.xpose.msra.mxu0 0.0
        %597 = vmatprep.subr.mxu0 0.0
        %598 = vmatpush1.xpose.msra.mxu0 0.0
        %599 = vmatprep.subr.mxu0 0.0
        %600 = vmatpush1.xpose.msra.mxu0 0.0
        %601 = vmatprep.subr.mxu0 0.0
        %602 = vmatpush1.xpose.msra.mxu0 0.0
        %603 = vmatprep.subr.mxu0 0.0
        %604 = vmatpush1.xpose.msra.mxu0 0.0
        %605 = vmatprep.subr.mxu0 0.0
        %606 = vmatpush1.xpose.msra.mxu0 0.0
        %607 = vmatprep.subr.mxu0 0.0
        %608 = vmatpush1.xpose.msra.mxu0 0.0
        %609 = vmatprep.subr.mxu0 0.0
        %610 = vmatpush1.xpose.msra.mxu0 0.0
        %611 = vmatprep.subr.mxu0 0.0
        %612 = vmatpush1.xpose.msra.mxu0 0.0
        %613 = vmatprep.subr.mxu0 0.0
        %614 = vmatpush1.xpose.msra.mxu0 0.0
        %615 = vmatprep.subr.mxu0 0.0
        %616 = vmatpush1.xpose.msra.mxu0 0.0
        %617 = vmatprep.subr.mxu0 0.0
        %618 = vmatpush1.xpose.msra.mxu0 0.0
        %619 = vmatprep.subr.mxu0 0.0
        %620 = vmatpush1.xpose.msra.mxu0 0.0
        %621 = vmatprep.subr.mxu0 0.0
        %622 = vmatpush1.xpose.msra.mxu0 0.0
        %623 = vmatprep.subr.mxu0 0.0
        %624 = vmatpush1.xpose.msra.mxu0 %v593
        %625 = vmatprep.subr.mxu0 0.0
        %626 = vmatpush1.xpose.msra.mxu0 %v590
        %627 = vmatprep.subr.mxu0 0.0
        %628 = vmatpush2.xpose.msra.mxu0 0.0
        %629 = vmatprep.subr.mxu0 0.0
        %630 = vmatpush2.xpose.msra.mxu0 0.0
        %631 = vmatprep.subr.mxu0 0.0
        %632 = vmatpush2.xpose.msra.mxu0 0.0
        %633 = vmatprep.subr.mxu0 0.0
        %634 = vmatpush2.xpose.msra.mxu0 0.0
        %635 = vmatprep.subr.mxu0 0.0
        %636 = vmatpush2.xpose.msra.mxu0 0.0
        %637 = vmatprep.subr.mxu0 0.0
        %638 = vmatpush2.xpose.msra.mxu0 0.0
        %639 = vmatprep.subr.mxu0 0.0
        %640 = vmatpush2.xpose.msra.mxu0 0.0
        %641 = vmatprep.subr.mxu0 0.0
        %642 = vmatpush2.xpose.msra.mxu0 0.0
        %643 = vmatprep.subr.mxu0 0.0
        %644 = vmatpush2.xpose.msra.mxu0 0.0
        %645 = vmatprep.subr.mxu0 0.0
        %646 = vmatpush2.xpose.msra.mxu0 0.0
        %647 = vmatprep.subr.mxu0 0.0
        %648 = vmatpush2.xpose.msra.mxu0 0.0
        %649 = vmatprep.subr.mxu0 0.0
        %650 = vmatpush2.xpose.msra.mxu0 0.0
        %651 = vmatprep.subr.mxu0 0.0
        %652 = vmatpush2.xpose.msra.mxu0 0.0
        %653 = vmatprep.subr.mxu0 0.0
        %654 = vmatpush2.xpose.msra.mxu0 0.0
        %655 = vmatprep.subr.mxu0 0.0
        %656 = vmatpush2.xpose.msra.mxu0 0.0
        %657 = vmatprep.subr.mxu0 0.0
        %658 = vmatpush2.xpose.msra.mxu0 0.0
        %659 = vmatprep.mubr.f32.mxu0 0.0
        %660 = vmatmul.mubr.f32.gmra.mxu0 %v587
        %v661 = vpop.f32.mrf.mxu0
        %v662 = vadd.f32 0.0, %v661
        %v663 = vpop.f32.mrf.mxu0
        %664 = vdwg.mxu0
        %vm665 = vcmask 130048
        %v666 = vsel %vm665, %v662, -inf
        %667 = vmax.xlane.f32.xlu0 %v666
        %v668 = vpop.xlane.xlu0 %667
        %v669 = vsub.f32 %v662, %v668
        %v670 = vmul.f32 %v669, 1.442695
        %v671 = vpow.pop %v670
        %v672 = vsel %vm665, %v671, 0.0
        %673 = vadd.xlane.f32.xlu0 %v672
        %v674 = vpop.xlane.xlu0 %673
        %v675 = vrcp.pop %v674
        %v676 = vmul.f32 %v671, %v675
        %677 = vrot.lane.b32.xlu0 %v577, 96
        %v678 = vpop.permute.xlu0 %677
        %679 = vrot.lane.b32.xlu0 %v582, 96
        %v680 = vpop.permute.xlu0 %679
        %v684 = vsel %vm665, %v676, 0
        %686 = vmatprep.subr.mxu0 0.0
        %687 = vmatpush1.msra.mxu0 0.0
        %688 = vmatprep.subr.mxu0 0.0
        %689 = vmatpush1.msra.mxu0 0.0
        %690 = vmatprep.subr.mxu0 0.0
        %691 = vmatpush1.msra.mxu0 0.0
        %692 = vmatprep.subr.mxu0 0.0
        %693 = vmatpush1.msra.mxu0 0.0
        %694 = vmatprep.subr.mxu0 0.0
        %695 = vmatpush1.msra.mxu0 0.0
        %696 = vmatprep.subr.mxu0 0.0
        %697 = vmatpush1.msra.mxu0 0.0
        %698 = vmatprep.subr.mxu0 0.0
        %699 = vmatpush1.msra.mxu0 0.0
        %700 = vmatprep.subr.mxu0 0.0
        %701 = vmatpush1.msra.mxu0 0.0
        %702 = vmatprep.subr.mxu0 0.0
        %703 = vmatpush1.msra.mxu0 0.0
        %704 = vmatprep.subr.mxu0 0.0
        %705 = vmatpush1.msra.mxu0 0.0
        %706 = vmatprep.subr.mxu0 0.0
        %707 = vmatpush1.msra.mxu0 0.0
        %708 = vmatprep.subr.mxu0 0.0
        %709 = vmatpush1.msra.mxu0 0.0
        %710 = vmatprep.subr.mxu0 0.0
        %711 = vmatpush1.msra.mxu0 0.0
        %712 = vmatprep.subr.mxu0 0.0
        %713 = vmatpush1.msra.mxu0 0.0
        %714 = vmatprep.subr.mxu0 0.0
        %715 = vmatpush1.msra.mxu0 %v680
        %716 = vmatprep.subr.mxu0 0.0
        %717 = vmatpush1.msra.mxu0 %v678
        %718 = vmatprep.subr.mxu0 0.0
        %719 = vmatpush2.msra.mxu0 0.0
        %720 = vmatprep.subr.mxu0 0.0
        %721 = vmatpush2.msra.mxu0 0.0
        %722 = vmatprep.subr.mxu0 0.0
        %723 = vmatpush2.msra.mxu0 0.0
        %724 = vmatprep.subr.mxu0 0.0
        %725 = vmatpush2.msra.mxu0 0.0
        %726 = vmatprep.subr.mxu0 0.0
        %727 = vmatpush2.msra.mxu0 0.0
        %728 = vmatprep.subr.mxu0 0.0
        %729 = vmatpush2.msra.mxu0 0.0
        %730 = vmatprep.subr.mxu0 0.0
        %731 = vmatpush2.msra.mxu0 0.0
        %732 = vmatprep.subr.mxu0 0.0
        %733 = vmatpush2.msra.mxu0 0.0
        %734 = vmatprep.subr.mxu0 0.0
        %735 = vmatpush2.msra.mxu0 0.0
        %736 = vmatprep.subr.mxu0 0.0
        %737 = vmatpush2.msra.mxu0 0.0
        %738 = vmatprep.subr.mxu0 0.0
        %739 = vmatpush2.msra.mxu0 0.0
        %740 = vmatprep.subr.mxu0 0.0
        %741 = vmatpush2.msra.mxu0 0.0
        %742 = vmatprep.subr.mxu0 0.0
        %743 = vmatpush2.msra.mxu0 0.0
        %744 = vmatprep.subr.mxu0 0.0
        %745 = vmatpush2.msra.mxu0 0.0
        %746 = vmatprep.subr.mxu0 0.0
        %747 = vmatpush2.msra.mxu0 0.0
        %748 = vmatprep.subr.mxu0 0.0
        %749 = vmatpush2.msra.mxu0 0.0
        %750 = vmatprep.mubr.f32.mxu0 0.0
        %751 = vmatmul.mubr.f32.gmra.mxu0 %v684
        %v752 = vpop.f32.mrf.mxu0
        %v753 = vadd.f32 0.0, %v752
        %v754 = vpop.f32.mrf.mxu0
        %755 = vdwg.mxu0
        %756 = vst.msk [vmem:[#allocation2] sm:$0xff] %vm585, %v753
        %757 = vrot.lane.b32.xlu0 %v492, 120
        %v758 = vpop.permute.xlu0 %757
        %759 = vrot.lane.b32.xlu0 %v577, 120
        %v760 = vpop.permute.xlu0 %759
        %761 = vrot.lane.b32.xlu0 %v582, 120
        %v762 = vpop.permute.xlu0 %761
        %v763 = vsel %vm585, %v758, 0
        %v765 = vsel %vm585, %v760, 0
        %v767 = vsel %vm585, %v762, 0
        %769 = vmatprep.subr.mxu0 0.0
        %770 = vmatpush1.xpose.msra.mxu0 0.0
        %771 = vmatprep.subr.mxu0 0.0
        %772 = vmatpush1.xpose.msra.mxu0 0.0
        %773 = vmatprep.subr.mxu0 0.0
        %774 = vmatpush1.xpose.msra.mxu0 0.0
        %775 = vmatprep.subr.mxu0 0.0
        %776 = vmatpush1.xpose.msra.mxu0 0.0
        %777 = vmatprep.subr.mxu0 0.0
        %778 = vmatpush1.xpose.msra.mxu0 0.0
        %779 = vmatprep.subr.mxu0 0.0
        %780 = vmatpush1.xpose.msra.mxu0 0.0
        %781 = vmatprep.subr.mxu0 0.0
        %782 = vmatpush1.xpose.msra.mxu0 0.0
        %783 = vmatprep.subr.mxu0 0.0
        %784 = vmatpush1.xpose.msra.mxu0 0.0
        %785 = vmatprep.subr.mxu0 0.0
        %786 = vmatpush1.xpose.msra.mxu0 0.0
        %787 = vmatprep.subr.mxu0 0.0
        %788 = vmatpush1.xpose.msra.mxu0 0.0
        %789 = vmatprep.subr.mxu0 0.0
        %790 = vmatpush1.xpose.msra.mxu0 0.0
        %791 = vmatprep.subr.mxu0 0.0
        %792 = vmatpush1.xpose.msra.mxu0 0.0
        %793 = vmatprep.subr.mxu0 0.0
        %794 = vmatpush1.xpose.msra.mxu0 0.0
        %795 = vmatprep.subr.mxu0 0.0
        %796 = vmatpush1.xpose.msra.mxu0 0.0
        %797 = vmatprep.subr.mxu0 0.0
        %798 = vmatpush1.xpose.msra.mxu0 %v767
        %799 = vmatprep.subr.mxu0 0.0
        %800 = vmatpush1.xpose.msra.mxu0 %v765
        %801 = vmatprep.subr.mxu0 0.0
        %802 = vmatpush2.xpose.msra.mxu0 0.0
        %803 = vmatprep.subr.mxu0 0.0
        %804 = vmatpush2.xpose.msra.mxu0 0.0
        %805 = vmatprep.subr.mxu0 0.0
        %806 = vmatpush2.xpose.msra.mxu0 0.0
        %807 = vmatprep.subr.mxu0 0.0
        %808 = vmatpush2.xpose.msra.mxu0 0.0
        %809 = vmatprep.subr.mxu0 0.0
        %810 = vmatpush2.xpose.msra.mxu0 0.0
        %811 = vmatprep.subr.mxu0 0.0
        %812 = vmatpush2.xpose.msra.mxu0 0.0
        %813 = vmatprep.subr.mxu0 0.0
        %814 = vmatpush2.xpose.msra.mxu0 0.0
        %815 = vmatprep.subr.mxu0 0.0
        %816 = vmatpush2.xpose.msra.mxu0 0.0
        %817 = vmatprep.subr.mxu0 0.0
        %818 = vmatpush2.xpose.msra.mxu0 0.0
        %819 = vmatprep.subr.mxu0 0.0
        %820 = vmatpush2.xpose.msra.mxu0 0.0
        %821 = vmatprep.subr.mxu0 0.0
        %822 = vmatpush2.xpose.msra.mxu0 0.0
        %823 = vmatprep.subr.mxu0 0.0
        %824 = vmatpush2.xpose.msra.mxu0 0.0
        %825 = vmatprep.subr.mxu0 0.0
        %826 = vmatpush2.xpose.msra.mxu0 0.0
        %827 = vmatprep.subr.mxu0 0.0
        %828 = vmatpush2.xpose.msra.mxu0 0.0
        %829 = vmatprep.subr.mxu0 0.0
        %830 = vmatpush2.xpose.msra.mxu0 0.0
        %831 = vmatprep.subr.mxu0 0.0
        %832 = vmatpush2.xpose.msra.mxu0 0.0
        %833 = vmatprep.mubr.f32.mxu0 0.0
        %834 = vmatmul.mubr.f32.gmra.mxu0 %v763
        %v835 = vpop.f32.mrf.mxu0
        %v836 = vadd.f32 0.0, %v835
        %v837 = vpop.f32.mrf.mxu0
        %838 = vdwg.mxu0
        %v839 = vsel %vm665, %v836, -inf
        %840 = vmax.xlane.f32.xlu0 %v839
        %v841 = vpop.xlane.xlu0 %840
        %v842 = vsub.f32 %v836, %v841
        %v843 = vmul.f32 %v842, 1.442695
        %v844 = vpow.pop %v843
        %v845 = vsel %vm665, %v844, 0.0
        %846 = vadd.xlane.f32.xlu0 %v845
        %v847 = vpop.xlane.xlu0 %846
        %v848 = vrcp.pop %v847
        %v849 = vmul.f32 %v844, %v848
        %850 = vrot.lane.b32.xlu0 %v577, 88
        %v851 = vpop.permute.xlu0 %850
        %852 = vrot.lane.b32.xlu0 %v582, 88
        %v853 = vpop.permute.xlu0 %852
        %v857 = vsel %vm665, %v849, 0
        %859 = vmatprep.subr.mxu0 0.0
        %860 = vmatpush1.msra.mxu0 0.0
        %861 = vmatprep.subr.mxu0 0.0
        %862 = vmatpush1.msra.mxu0 0.0
        %863 = vmatprep.subr.mxu0 0.0
        %864 = vmatpush1.msra.mxu0 0.0
        %865 = vmatprep.subr.mxu0 0.0
        %866 = vmatpush1.msra.mxu0 0.0
        %867 = vmatprep.subr.mxu0 0.0
        %868 = vmatpush1.msra.mxu0 0.0
        %869 = vmatprep.subr.mxu0 0.0
        %870 = vmatpush1.msra.mxu0 0.0
        %871 = vmatprep.subr.mxu0 0.0
        %872 = vmatpush1.msra.mxu0 0.0
        %873 = vmatprep.subr.mxu0 0.0
        %874 = vmatpush1.msra.mxu0 0.0
        %875 = vmatprep.subr.mxu0 0.0
        %876 = vmatpush1.msra.mxu0 0.0
        %877 = vmatprep.subr.mxu0 0.0
        %878 = vmatpush1.msra.mxu0 0.0
        %879 = vmatprep.subr.mxu0 0.0
        %880 = vmatpush1.msra.mxu0 0.0
        %881 = vmatprep.subr.mxu0 0.0
        %882 = vmatpush1.msra.mxu0 0.0
        %883 = vmatprep.subr.mxu0 0.0
        %884 = vmatpush1.msra.mxu0 0.0
        %885 = vmatprep.subr.mxu0 0.0
        %886 = vmatpush1.msra.mxu0 0.0
        %887 = vmatprep.subr.mxu0 0.0
        %888 = vmatpush1.msra.mxu0 %v853
        %889 = vmatprep.subr.mxu0 0.0
        %890 = vmatpush1.msra.mxu0 %v851
        %891 = vmatprep.subr.mxu0 0.0
        %892 = vmatpush2.msra.mxu0 0.0
        %893 = vmatprep.subr.mxu0 0.0
        %894 = vmatpush2.msra.mxu0 0.0
        %895 = vmatprep.subr.mxu0 0.0
        %896 = vmatpush2.msra.mxu0 0.0
        %897 = vmatprep.subr.mxu0 0.0
        %898 = vmatpush2.msra.mxu0 0.0
        %899 = vmatprep.subr.mxu0 0.0
        %900 = vmatpush2.msra.mxu0 0.0
        %901 = vmatprep.subr.mxu0 0.0
        %902 = vmatpush2.msra.mxu0 0.0
        %903 = vmatprep.subr.mxu0 0.0
        %904 = vmatpush2.msra.mxu0 0.0
        %905 = vmatprep.subr.mxu0 0.0
        %906 = vmatpush2.msra.mxu0 0.0
        %907 = vmatprep.subr.mxu0 0.0
        %908 = vmatpush2.msra.mxu0 0.0
        %909 = vmatprep.subr.mxu0 0.0
        %910 = vmatpush2.msra.mxu0 0.0
        %911 = vmatprep.subr.mxu0 0.0
        %912 = vmatpush2.msra.mxu0 0.0
        %913 = vmatprep.subr.mxu0 0.0
        %914 = vmatpush2.msra.mxu0 0.0
        %915 = vmatprep.subr.mxu0 0.0
        %916 = vmatpush2.msra.mxu0 0.0
        %917 = vmatprep.subr.mxu0 0.0
        %918 = vmatpush2.msra.mxu0 0.0
        %919 = vmatprep.subr.mxu0 0.0
        %920 = vmatpush2.msra.mxu0 0.0
        %921 = vmatprep.subr.mxu0 0.0
        %922 = vmatpush2.msra.mxu0 0.0
        %923 = vmatprep.mubr.f32.mxu0 0.0
        %924 = vmatmul.mubr.f32.gmra.mxu0 %v857
        %v925 = vpop.f32.mrf.mxu0
        %v926 = vadd.f32 0.0, %v925
        %v927 = vpop.f32.mrf.mxu0
        %928 = vdwg.mxu0
        %930 = vrot.lane.b32.xlu0 %v926, 8
        %v931 = vpop.permute.xlu0 %930
        %vm933 = vcmask 130112
        %934 = vst.msk [vmem:[#allocation2] sm:$0xff] %vm933, %v931
        %935 = vrot.lane.b32.xlu0 %v492, 112
        %v936 = vpop.permute.xlu0 %935
        %937 = vrot.lane.b32.xlu0 %v577, 112
        %v938 = vpop.permute.xlu0 %937
        %939 = vrot.lane.b32.xlu0 %v582, 112
        %v940 = vpop.permute.xlu0 %939
        %v941 = vsel %vm585, %v936, 0
        %v943 = vsel %vm585, %v938, 0
        %v945 = vsel %vm585, %v940, 0
        %947 = vmatprep.subr.mxu0 0.0
        %948 = vmatpush1.xpose.msra.mxu0 0.0
        %949 = vmatprep.subr.mxu0 0.0
        %950 = vmatpush1.xpose.msra.mxu0 0.0
        %951 = vmatprep.subr.mxu0 0.0
        %952 = vmatpush1.xpose.msra.mxu0 0.0
        %953 = vmatprep.subr.mxu0 0.0
        %954 = vmatpush1.xpose.msra.mxu0 0.0
        %955 = vmatprep.subr.mxu0 0.0
        %956 = vmatpush1.xpose.msra.mxu0 0.0
        %957 = vmatprep.subr.mxu0 0.0
        %958 = vmatpush1.xpose.msra.mxu0 0.0
        %959 = vmatprep.subr.mxu0 0.0
        %960 = vmatpush1.xpose.msra.mxu0 0.0
        %961 = vmatprep.subr.mxu0 0.0
        %962 = vmatpush1.xpose.msra.mxu0 0.0
        %963 = vmatprep.subr.mxu0 0.0
        %964 = vmatpush1.xpose.msra.mxu0 0.0
        %965 = vmatprep.subr.mxu0 0.0
        %966 = vmatpush1.xpose.msra.mxu0 0.0
        %967 = vmatprep.subr.mxu0 0.0
        %968 = vmatpush1.xpose.msra.mxu0 0.0
        %969 = vmatprep.subr.mxu0 0.0
        %970 = vmatpush1.xpose.msra.mxu0 0.0
        %971 = vmatprep.subr.mxu0 0.0
        %972 = vmatpush1.xpose.msra.mxu0 0.0
        %973 = vmatprep.subr.mxu0 0.0
        %974 = vmatpush1.xpose.msra.mxu0 0.0
        %975 = vmatprep.subr.mxu0 0.0
        %976 = vmatpush1.xpose.msra.mxu0 %v945
        %977 = vmatprep.subr.mxu0 0.0
        %978 = vmatpush1.xpose.msra.mxu0 %v943
        %979 = vmatprep.subr.mxu0 0.0
        %980 = vmatpush2.xpose.msra.mxu0 0.0
        %981 = vmatprep.subr.mxu0 0.0
        %982 = vmatpush2.xpose.msra.mxu0 0.0
        %983 = vmatprep.subr.mxu0 0.0
        %984 = vmatpush2.xpose.msra.mxu0 0.0
        %985 = vmatprep.subr.mxu0 0.0
        %986 = vmatpush2.xpose.msra.mxu0 0.0
        %987 = vmatprep.subr.mxu0 0.0
        %988 = vmatpush2.xpose.msra.mxu0 0.0
        %989 = vmatprep.subr.mxu0 0.0
        %990 = vmatpush2.xpose.msra.mxu0 0.0
        %991 = vmatprep.subr.mxu0 0.0
        %992 = vmatpush2.xpose.msra.mxu0 0.0
        %993 = vmatprep.subr.mxu0 0.0
        %994 = vmatpush2.xpose.msra.mxu0 0.0
        %995 = vmatprep.subr.mxu0 0.0
        %996 = vmatpush2.xpose.msra.mxu0 0.0
        %997 = vmatprep.subr.mxu0 0.0
        %998 = vmatpush2.xpose.msra.mxu0 0.0
        %999 = vmatprep.subr.mxu0 0.0
        %1000 = vmatpush2.xpose.msra.mxu0 0.0
        %1001 = vmatprep.subr.mxu0 0.0
        %1002 = vmatpush2.xpose.msra.mxu0 0.0
        %1003 = vmatprep.subr.mxu0 0.0
        %1004 = vmatpush2.xpose.msra.mxu0 0.0
        %1005 = vmatprep.subr.mxu0 0.0
        %1006 = vmatpush2.xpose.msra.mxu0 0.0
        %1007 = vmatprep.subr.mxu0 0.0
        %1008 = vmatpush2.xpose.msra.mxu0 0.0
        %1009 = vmatprep.subr.mxu0 0.0
        %1010 = vmatpush2.xpose.msra.mxu0 0.0
        %1011 = vmatprep.mubr.f32.mxu0 0.0
        %1012 = vmatmul.mubr.f32.gmra.mxu0 %v941
        %v1013 = vpop.f32.mrf.mxu0
        %v1014 = vadd.f32 0.0, %v1013
        %v1015 = vpop.f32.mrf.mxu0
        %1016 = vdwg.mxu0
        %v1017 = vsel %vm665, %v1014, -inf
        %1018 = vmax.xlane.f32.xlu0 %v1017
        %v1019 = vpop.xlane.xlu0 %1018
        %v1020 = vsub.f32 %v1014, %v1019
        %v1021 = vmul.f32 %v1020, 1.442695
        %v1022 = vpow.pop %v1021
        %v1023 = vsel %vm665, %v1022, 0.0
        %1024 = vadd.xlane.f32.xlu0 %v1023
        %v1025 = vpop.xlane.xlu0 %1024
        %v1026 = vrcp.pop %v1025
        %v1027 = vmul.f32 %v1022, %v1026
        %1028 = vrot.lane.b32.xlu0 %v577, 80
        %v1029 = vpop.permute.xlu0 %1028
        %1030 = vrot.lane.b32.xlu0 %v582, 80
        %v1031 = vpop.permute.xlu0 %1030
        %v1035 = vsel %vm665, %v1027, 0
        %1037 = vmatprep.subr.mxu0 0.0
        %1038 = vmatpush1.msra.mxu0 0.0
        %1039 = vmatprep.subr.mxu0 0.0
        %1040 = vmatpush1.msra.mxu0 0.0
        %1041 = vmatprep.subr.mxu0 0.0
        %1042 = vmatpush1.msra.mxu0 0.0
        %1043 = vmatprep.subr.mxu0 0.0
        %1044 = vmatpush1.msra.mxu0 0.0
        %1045 = vmatprep.subr.mxu0 0.0
        %1046 = vmatpush1.msra.mxu0 0.0
        %1047 = vmatprep.subr.mxu0 0.0
        %1048 = vmatpush1.msra.mxu0 0.0
        %1049 = vmatprep.subr.mxu0 0.0
        %1050 = vmatpush1.msra.mxu0 0.0
        %1051 = vmatprep.subr.mxu0 0.0
        %1052 = vmatpush1.msra.mxu0 0.0
        %1053 = vmatprep.subr.mxu0 0.0
        %1054 = vmatpush1.msra.mxu0 0.0
        %1055 = vmatprep.subr.mxu0 0.0
        %1056 = vmatpush1.msra.mxu0 0.0
        %1057 = vmatprep.subr.mxu0 0.0
        %1058 = vmatpush1.msra.mxu0 0.0
        %1059 = vmatprep.subr.mxu0 0.0
        %1060 = vmatpush1.msra.mxu0 0.0
        %1061 = vmatprep.subr.mxu0 0.0
        %1062 = vmatpush1.msra.mxu0 0.0
        %1063 = vmatprep.subr.mxu0 0.0
        %1064 = vmatpush1.msra.mxu0 0.0
        %1065 = vmatprep.subr.mxu0 0.0
        %1066 = vmatpush1.msra.mxu0 %v1031
        %1067 = vmatprep.subr.mxu0 0.0
        %1068 = vmatpush1.msra.mxu0 %v1029
        %1069 = vmatprep.subr.mxu0 0.0
        %1070 = vmatpush2.msra.mxu0 0.0
        %1071 = vmatprep.subr.mxu0 0.0
        %1072 = vmatpush2.msra.mxu0 0.0
        %1073 = vmatprep.subr.mxu0 0.0
        %1074 = vmatpush2.msra.mxu0 0.0
        %1075 = vmatprep.subr.mxu0 0.0
        %1076 = vmatpush2.msra.mxu0 0.0
        %1077 = vmatprep.subr.mxu0 0.0
        %1078 = vmatpush2.msra.mxu0 0.0
        %1079 = vmatprep.subr.mxu0 0.0
        %1080 = vmatpush2.msra.mxu0 0.0
        %1081 = vmatprep.subr.mxu0 0.0
        %1082 = vmatpush2.msra.mxu0 0.0
        %1083 = vmatprep.subr.mxu0 0.0
        %1084 = vmatpush2.msra.mxu0 0.0
        %1085 = vmatprep.subr.mxu0 0.0
        %1086 = vmatpush2.msra.mxu0 0.0
        %1087 = vmatprep.subr.mxu0 0.0
        %1088 = vmatpush2.msra.mxu0 0.0
        %1089 = vmatprep.subr.mxu0 0.0
        %1090 = vmatpush2.msra.mxu0 0.0
        %1091 = vmatprep.subr.mxu0 0.0
        %1092 = vmatpush2.msra.mxu0 0.0
        %1093 = vmatprep.subr.mxu0 0.0
        %1094 = vmatpush2.msra.mxu0 0.0
        %1095 = vmatprep.subr.mxu0 0.0
        %1096 = vmatpush2.msra.mxu0 0.0
        %1097 = vmatprep.subr.mxu0 0.0
        %1098 = vmatpush2.msra.mxu0 0.0
        %1099 = vmatprep.subr.mxu0 0.0
        %1100 = vmatpush2.msra.mxu0 0.0
        %1101 = vmatprep.mubr.f32.mxu0 0.0
        %1102 = vmatmul.mubr.f32.gmra.mxu0 %v1035
        %v1103 = vpop.f32.mrf.mxu0
        %v1104 = vadd.f32 0.0, %v1103
        %v1105 = vpop.f32.mrf.mxu0
        %1106 = vdwg.mxu0
        %1108 = vrot.lane.b32.xlu0 %v1104, 16
        %v1109 = vpop.permute.xlu0 %1108
        %vm1111 = vcmask 195712
        %1112 = vst.msk [vmem:[#allocation2] sm:$0xff] %vm1111, %v1109
        %1113 = vrot.lane.b32.xlu0 %v492, 104
        %v1114 = vpop.permute.xlu0 %1113
        %1115 = vrot.lane.b32.xlu0 %v577, 104
        %v1116 = vpop.permute.xlu0 %1115
        %1117 = vrot.lane.b32.xlu0 %v582, 104
        %v1118 = vpop.permute.xlu0 %1117
        %v1119 = vsel %vm585, %v1114, 0
        %v1121 = vsel %vm585, %v1116, 0
        %v1123 = vsel %vm585, %v1118, 0
        %1125 = vmatprep.subr.mxu0 0.0
        %1126 = vmatpush1.xpose.msra.mxu0 0.0
        %1127 = vmatprep.subr.mxu0 0.0
        %1128 = vmatpush1.xpose.msra.mxu0 0.0
        %1129 = vmatprep.subr.mxu0 0.0
        %1130 = vmatpush1.xpose.msra.mxu0 0.0
        %1131 = vmatprep.subr.mxu0 0.0
        %1132 = vmatpush1.xpose.msra.mxu0 0.0
        %1133 = vmatprep.subr.mxu0 0.0
        %1134 = vmatpush1.xpose.msra.mxu0 0.0
        %1135 = vmatprep.subr.mxu0 0.0
        %1136 = vmatpush1.xpose.msra.mxu0 0.0
        %1137 = vmatprep.subr.mxu0 0.0
        %1138 = vmatpush1.xpose.msra.mxu0 0.0
        %1139 = vmatprep.subr.mxu0 0.0
        %1140 = vmatpush1.xpose.msra.mxu0 0.0
        %1141 = vmatprep.subr.mxu0 0.0
        %1142 = vmatpush1.xpose.msra.mxu0 0.0
        %1143 = vmatprep.subr.mxu0 0.0
        %1144 = vmatpush1.xpose.msra.mxu0 0.0
        %1145 = vmatprep.subr.mxu0 0.0
        %1146 = vmatpush1.xpose.msra.mxu0 0.0
        %1147 = vmatprep.subr.mxu0 0.0
        %1148 = vmatpush1.xpose.msra.mxu0 0.0
        %1149 = vmatprep.subr.mxu0 0.0
        %1150 = vmatpush1.xpose.msra.mxu0 0.0
        %1151 = vmatprep.subr.mxu0 0.0
        %1152 = vmatpush1.xpose.msra.mxu0 0.0
        %1153 = vmatprep.subr.mxu0 0.0
        %1154 = vmatpush1.xpose.msra.mxu0 %v1123
        %1155 = vmatprep.subr.mxu0 0.0
        %1156 = vmatpush1.xpose.msra.mxu0 %v1121
        %1157 = vmatprep.subr.mxu0 0.0
        %1158 = vmatpush2.xpose.msra.mxu0 0.0
        %1159 = vmatprep.subr.mxu0 0.0
        %1160 = vmatpush2.xpose.msra.mxu0 0.0
        %1161 = vmatprep.subr.mxu0 0.0
        %1162 = vmatpush2.xpose.msra.mxu0 0.0
        %1163 = vmatprep.subr.mxu0 0.0
        %1164 = vmatpush2.xpose.msra.mxu0 0.0
        %1165 = vmatprep.subr.mxu0 0.0
        %1166 = vmatpush2.xpose.msra.mxu0 0.0
        %1167 = vmatprep.subr.mxu0 0.0
        %1168 = vmatpush2.xpose.msra.mxu0 0.0
        %1169 = vmatprep.subr.mxu0 0.0
        %1170 = vmatpush2.xpose.msra.mxu0 0.0
        %1171 = vmatprep.subr.mxu0 0.0
        %1172 = vmatpush2.xpose.msra.mxu0 0.0
        %1173 = vmatprep.subr.mxu0 0.0
        %1174 = vmatpush2.xpose.msra.mxu0 0.0
        %1175 = vmatprep.subr.mxu0 0.0
        %1176 = vmatpush2.xpose.msra.mxu0 0.0
        %1177 = vmatprep.subr.mxu0 0.0
        %1178 = vmatpush2.xpose.msra.mxu0 0.0
        %1179 = vmatprep.subr.mxu0 0.0
        %1180 = vmatpush2.xpose.msra.mxu0 0.0
        %1181 = vmatprep.subr.mxu0 0.0
        %1182 = vmatpush2.xpose.msra.mxu0 0.0
        %1183 = vmatprep.subr.mxu0 0.0
        %1184 = vmatpush2.xpose.msra.mxu0 0.0
        %1185 = vmatprep.subr.mxu0 0.0
        %1186 = vmatpush2.xpose.msra.mxu0 0.0
        %1187 = vmatprep.subr.mxu0 0.0
        %1188 = vmatpush2.xpose.msra.mxu0 0.0
        %1189 = vmatprep.mubr.f32.mxu0 0.0
        %1190 = vmatmul.mubr.f32.gmra.mxu0 %v1119
        %v1191 = vpop.f32.mrf.mxu0
        %v1192 = vadd.f32 0.0, %v1191
        %v1193 = vpop.f32.mrf.mxu0
        %1194 = vdwg.mxu0
        %v1195 = vsel %vm665, %v1192, -inf
        %1196 = vmax.xlane.f32.xlu0 %v1195
        %v1197 = vpop.xlane.xlu0 %1196
        %v1198 = vsub.f32 %v1192, %v1197
        %v1199 = vmul.f32 %v1198, 1.442695
        %v1200 = vpow.pop %v1199
        %v1201 = vsel %vm665, %v1200, 0.0
        %1202 = vadd.xlane.f32.xlu0 %v1201
        %v1203 = vpop.xlane.xlu0 %1202
        %v1204 = vrcp.pop %v1203
        %v1205 = vmul.f32 %v1200, %v1204
        %1206 = vrot.lane.b32.xlu0 %v577, 72
        %v1207 = vpop.permute.xlu0 %1206
        %1208 = vrot.lane.b32.xlu0 %v582, 72
        %v1209 = vpop.permute.xlu0 %1208
        %v1213 = vsel %vm665, %v1205, 0
        %1215 = vmatprep.subr.mxu0 0.0
        %1216 = vmatpush1.msra.mxu0 0.0
        %1217 = vmatprep.subr.mxu0 0.0
        %1218 = vmatpush1.msra.mxu0 0.0
        %1219 = vmatprep.subr.mxu0 0.0
        %1220 = vmatpush1.msra.mxu0 0.0
        %1221 = vmatprep.subr.mxu0 0.0
        %1222 = vmatpush1.msra.mxu0 0.0
        %1223 = vmatprep.subr.mxu0 0.0
        %1224 = vmatpush1.msra.mxu0 0.0
        %1225 = vmatprep.subr.mxu0 0.0
        %1226 = vmatpush1.msra.mxu0 0.0
        %1227 = vmatprep.subr.mxu0 0.0
        %1228 = vmatpush1.msra.mxu0 0.0
        %1229 = vmatprep.subr.mxu0 0.0
        %1230 = vmatpush1.msra.mxu0 0.0
        %1231 = vmatprep.subr.mxu0 0.0
        %1232 = vmatpush1.msra.mxu0 0.0
        %1233 = vmatprep.subr.mxu0 0.0
        %1234 = vmatpush1.msra.mxu0 0.0
        %1235 = vmatprep.subr.mxu0 0.0
        %1236 = vmatpush1.msra.mxu0 0.0
        %1237 = vmatprep.subr.mxu0 0.0
        %1238 = vmatpush1.msra.mxu0 0.0
        %1239 = vmatprep.subr.mxu0 0.0
        %1240 = vmatpush1.msra.mxu0 0.0
        %1241 = vmatprep.subr.mxu0 0.0
        %1242 = vmatpush1.msra.mxu0 0.0
        %1243 = vmatprep.subr.mxu0 0.0
        %1244 = vmatpush1.msra.mxu0 %v1209
        %1245 = vmatprep.subr.mxu0 0.0
        %1246 = vmatpush1.msra.mxu0 %v1207
        %1247 = vmatprep.subr.mxu0 0.0
        %1248 = vmatpush2.msra.mxu0 0.0
        %1249 = vmatprep.subr.mxu0 0.0
        %1250 = vmatpush2.msra.mxu0 0.0
        %1251 = vmatprep.subr.mxu0 0.0
        %1252 = vmatpush2.msra.mxu0 0.0
        %1253 = vmatprep.subr.mxu0 0.0
        %1254 = vmatpush2.msra.mxu0 0.0
        %1255 = vmatprep.subr.mxu0 0.0
        %1256 = vmatpush2.msra.mxu0 0.0
        %1257 = vmatprep.subr.mxu0 0.0
        %1258 = vmatpush2.msra.mxu0 0.0
        %1259 = vmatprep.subr.mxu0 0.0
        %1260 = vmatpush2.msra.mxu0 0.0
        %1261 = vmatprep.subr.mxu0 0.0
        %1262 = vmatpush2.msra.mxu0 0.0
        %1263 = vmatprep.subr.mxu0 0.0
        %1264 = vmatpush2.msra.mxu0 0.0
        %1265 = vmatprep.subr.mxu0 0.0
        %1266 = vmatpush2.msra.mxu0 0.0
        %1267 = vmatprep.subr.mxu0 0.0
        %1268 = vmatpush2.msra.mxu0 0.0
        %1269 = vmatprep.subr.mxu0 0.0
        %1270 = vmatpush2.msra.mxu0 0.0
        %1271 = vmatprep.subr.mxu0 0.0
        %1272 = vmatpush2.msra.mxu0 0.0
        %1273 = vmatprep.subr.mxu0 0.0
        %1274 = vmatpush2.msra.mxu0 0.0
        %1275 = vmatprep.subr.mxu0 0.0
        %1276 = vmatpush2.msra.mxu0 0.0
        %1277 = vmatprep.subr.mxu0 0.0
        %1278 = vmatpush2.msra.mxu0 0.0
        %1279 = vmatprep.mubr.f32.mxu0 0.0
        %1280 = vmatmul.mubr.f32.gmra.mxu0 %v1213
        %v1281 = vpop.f32.mrf.mxu0
        %v1282 = vadd.f32 0.0, %v1281
        %v1283 = vpop.f32.mrf.mxu0
        %1284 = vdwg.mxu0
        %1286 = vrot.lane.b32.xlu0 %v1282, 24
        %v1287 = vpop.permute.xlu0 %1286
        %vm1289 = vcmask 261312
        %1290 = vst.msk [vmem:[#allocation2] sm:$0xff] %vm1289, %v1287
        %v1291 = vld [vmem:[#allocation2] sm:$0xff]
        %v1292 = vld [vmem:[#allocation11] sm:$0xff]
        %v1293 = vld [vmem:[#allocation11 + $0x8] sm:$0xff]
        %v1294 = vld [vmem:[#allocation11 + $0x10] sm:$0xff]
        %v1295 = vld [vmem:[#allocation11 + $0x18] sm:$0xff]
        %v1296 = vld [vmem:[%s7] sm:$0x1]
        %v1298 = vlaneseq
        %v1299 = vshrl.u32 %v1298, 7
        %v1300 = vsub.s32 0, %v1299
        %v1301 = vrot.slane %v1296, %v1300
        %v1304 = vsel %vm418, %v1291, 0
        %1306 = vmatprep.subr.mxu0 0.0
        %1307 = vmatpush1.msra.mxu0 0.0
        %1308 = vmatprep.subr.mxu0 0.0
        %1309 = vmatpush1.msra.mxu0 0.0
        %1310 = vmatprep.subr.mxu0 0.0
        %1311 = vmatpush1.msra.mxu0 0.0
        %1312 = vmatprep.subr.mxu0 0.0
        %1313 = vmatpush1.msra.mxu0 0.0
        %1314 = vmatprep.subr.mxu0 0.0
        %1315 = vmatpush1.msra.mxu0 0.0
        %1316 = vmatprep.subr.mxu0 0.0
        %1317 = vmatpush1.msra.mxu0 0.0
        %1318 = vmatprep.subr.mxu0 0.0
        %1319 = vmatpush1.msra.mxu0 0.0
        %1320 = vmatprep.subr.mxu0 0.0
        %1321 = vmatpush1.msra.mxu0 0.0
        %1322 = vmatprep.subr.mxu0 0.0
        %1323 = vmatpush1.msra.mxu0 0.0
        %1324 = vmatprep.subr.mxu0 0.0
        %1325 = vmatpush1.msra.mxu0 0.0
        %1326 = vmatprep.subr.mxu0 0.0
        %1327 = vmatpush1.msra.mxu0 0.0
        %1328 = vmatprep.subr.mxu0 0.0
        %1329 = vmatpush1.msra.mxu0 0.0
        %1330 = vmatprep.subr.mxu0 0.0
        %1331 = vmatpush1.msra.mxu0 %v1295
        %1332 = vmatprep.subr.mxu0 0.0
        %1333 = vmatpush1.msra.mxu0 %v1294
        %1334 = vmatprep.subr.mxu0 0.0
        %1335 = vmatpush1.msra.mxu0 %v1293
        %1336 = vmatprep.subr.mxu0 0.0
        %1337 = vmatpush1.msra.mxu0 %v1292
        %1338 = vmatprep.subr.mxu0 0.0
        %1339 = vmatpush2.msra.mxu0 0.0
        %1340 = vmatprep.subr.mxu0 0.0
        %1341 = vmatpush2.msra.mxu0 0.0
        %1342 = vmatprep.subr.mxu0 0.0
        %1343 = vmatpush2.msra.mxu0 0.0
        %1344 = vmatprep.subr.mxu0 0.0
        %1345 = vmatpush2.msra.mxu0 0.0
        %1346 = vmatprep.subr.mxu0 0.0
        %1347 = vmatpush2.msra.mxu0 0.0
        %1348 = vmatprep.subr.mxu0 0.0
        %1349 = vmatpush2.msra.mxu0 0.0
        %1350 = vmatprep.subr.mxu0 0.0
        %1351 = vmatpush2.msra.mxu0 0.0
        %1352 = vmatprep.subr.mxu0 0.0
        %1353 = vmatpush2.msra.mxu0 0.0
        %1354 = vmatprep.subr.mxu0 0.0
        %1355 = vmatpush2.msra.mxu0 0.0
        %1356 = vmatprep.subr.mxu0 0.0
        %1357 = vmatpush2.msra.mxu0 0.0
        %1358 = vmatprep.subr.mxu0 0.0
        %1359 = vmatpush2.msra.mxu0 0.0
        %1360 = vmatprep.subr.mxu0 0.0
        %1361 = vmatpush2.msra.mxu0 0.0
        %1362 = vmatprep.subr.mxu0 0.0
        %1363 = vmatpush2.msra.mxu0 0.0
        %1364 = vmatprep.subr.mxu0 0.0
        %1365 = vmatpush2.msra.mxu0 0.0
        %1366 = vmatprep.subr.mxu0 0.0
        %1367 = vmatpush2.msra.mxu0 0.0
        %1368 = vmatprep.subr.mxu0 0.0
        %1369 = vmatpush2.msra.mxu0 0.0
        %1370 = vmatprep.mubr.f32.mxu0 0.0
        %1371 = vmatmul.mubr.f32.gmra.mxu0 %v1304
        %v1372 = vpop.f32.mrf.mxu0
        %v1373 = vadd.f32 %v1301, %v1372
        %v1374 = vpop.f32.mrf.mxu0
        %1375 = vdwg.mxu0
        %1376 = vst.msk [vmem:[%s403] sm:$0xff] %vm418, %v1373
        %s1377 = sand.u32 %s215, 1
        %s1378 = scalar_lea.sflag [#allocation5], %s1377
        %s1379 = sand.u32 %s215, 1
        %s1380 = smul.addr %s1379, 8
        %s1381 = scalar_lea.vmem [#allocation12], %s1380
        // Predicated region
        $region73: #{tpu_custom_call.1} parent=51 // pred_check
          %p1382 = pneg %p225
        $region74: #{tpu_custom_call.1} parent=51 // pred_check_branch
          %1384 = sbr.rel (%p1382) target = $region76
        $region75: #{tpu_custom_call.1} parent=51 // pred_region
          %s1386 = ssub.s32 128, 128
          %1387 = vsyncadd %s1378, %s1386
          %s1388 = smul.addr %s29, 128
          %s1389 = scalar_lea.hbm %s8, %s1388
          %s1391 = sshll.u32 %s1381, 4
          %s1392 = int_to_ptr.vmem [resolvable:$true] %s1391
          %1394 = dma.vmem_to_hbm [thread:$0]  %s1392, 128, %s1389, %s1378
        $region76: #{tpu_custom_call.1} parent=51 // pred_fallthru
          _
      $region52: #{tpu_custom_call.1} parent=5 // pred_fallthru
        _
      %p1395 = scmp.le.s32.totalorder 2, %s24
      // Predicated region
      $region77: #{tpu_custom_call.1} parent=5 // pred_check
        %p1396 = pneg %p1395
      $region78: #{tpu_custom_call.1} parent=5 // pred_check_branch
        %1398 = sbr.rel (%p1396) target = $region80
      $region79: #{tpu_custom_call.1} parent=5 // pred_region
        %s1399 = ssub.s32 %s24, 2
        // Predicated region
        $region81: #{tpu_custom_call.1} parent=79 // pred_check
          %p1400 = pneg %p231
        $region82: #{tpu_custom_call.1} parent=79 // pred_check_branch
          %1402 = sbr.rel (%p1400) target = $region84
        $region83: #{tpu_custom_call.1} parent=79 // pred_region
          %s1403 = sand.u32 %s216, 1
          %s1404 = scalar_lea.sflag [#allocation5], %s1403
          %s1405 = sand.u32 %s216, 1
          %s1406 = smul.addr %s1405, 8
          %s1407 = scalar_lea.vmem [#allocation12], %s1406
          %1408 = dma.done %s1404, 128
        $region84: #{tpu_custom_call.1} parent=79 // pred_fallthru
          _
      $region80: #{tpu_custom_call.1} parent=5 // pred_fallthru
        _
    $region6: #{tpu_custom_call.1} parent=1 // loop_footer
      %s28 = sadd.s32 1, %s24
    $region7: #{tpu_custom_call.1} parent=1 // loop_footer_branch
      %23 = sbr.rel target = $region3
    $region8: #{tpu_custom_call.1} parent=1 // loop_exit
      _
    %1409 = vsyncpa [#allocation4], 1
    %s1410 = scalar_lea.sflag [#allocation4], 1
    %1411 = vsyncpa %s1410, 1
    %1412 = vsyncpa [#allocation7], 1
    %s1413 = scalar_lea.sflag [#allocation7], 1
    %1414 = vsyncpa %s1413, 1
    %1415 = vsyncpa [#allocation10], 1
    %1416 = vsyncpa [#allocation5], 1
    %s1417 = scalar_lea.sflag [#allocation5], 1
    %1418 = vsyncpa %s1417, 1

</llo_original>
